<compile_context>
chip_gen: v7x
topology: tpu7x:2x2x1
jax: 0.10.0
libtpu: 0.0.40
codegen_flags: <defaults>
</compile_context>

<pallas_src>
import jax
import jax.numpy as jnp
from jax import lax
from jax.experimental import pallas as pl
from jax.experimental.pallas import tpu as pltpu

NUM_LAYERS = 8
INNER = 16          # fixed intermediate width of each MLP (fc1 out / fc2 in)
INNER_PAD = 128     # pad the intermediate to one full lane group (exact: zeros)


def _gelu_exact(x):
    # PyTorch nn.GELU() default = exact (erf-based) GELU.
    return 0.5 * x * (1.0 + lax.erf(x * 0.7071067811865476))


def eight_mlp_kernel(x_ref, w1_ref, w2_ref, out_ref):
    # x_ref:   (TB, H)              float32   (one batch tile)
    # w1_ref:  (8, H, INNER_PAD)    float32   (pre-transposed + zero-padded fc1)
    # w2_ref:  (8, INNER_PAD, H)    float32   (pre-transposed + zero-padded fc2)
    x = x_ref[...]
    x = x + x  # head op: x = x + x

    for i in range(NUM_LAYERS):
        t = jnp.dot(x, w1_ref[i], preferred_element_type=jnp.float32)  # (TB, 128)
        t = _gelu_exact(t)                                             # gelu(0)==0 on pad
        x = jnp.dot(t, w2_ref[i], preferred_element_type=jnp.float32)  # (TB, H)
        if i in (0, 1):  # after mlp1 / mlp2: x = x * 2
            x = x * 2.0

    # tail ops folded: (x*2)*4 + 4 == x*8 + 4 (exact for f32 powers of two)
    out_ref[...] = (x * 8.0 + 4.0).astype(out_ref.dtype)


def _pick_batch_tile(B):
    # Single tile for small batches; otherwise a multiple of 8 that keeps the
    # pipeline >= 2 deep without blowing v7x's 64 MiB VMEM.
    if B <= 512:
        return B
    for tb in (512, 384, 256, 128, 64, 32, 16, 8):
        if B % tb == 0:
            return tb
    return 512  # ragged tail handled by cdiv + masked output writes


def eight_mlp_with_ops_tail(x, fc1_w, fc2_w, *, tb=None):
    """x: (B, H).  fc1_w: (8, 16, H), fc2_w: (8, H, 16) in PyTorch Linear layout."""
    B, H = x.shape

    # Pre-transpose once outside the kernel so the MXU consumes stored layouts,
    # then zero-pad the INNER dim to a full lane group (exact: see kernel docs).
    w1 = jnp.transpose(fc1_w, (0, 2, 1))                   # (8, H, 16)
    w2 = jnp.transpose(fc2_w, (0, 2, 1))                   # (8, 16, H)
    w1 = jnp.pad(w1, ((0, 0), (0, 0), (0, INNER_PAD - INNER)))  # (8, H, 128)
    w2 = jnp.pad(w2, ((0, 0), (0, INNER_PAD - INNER), (0, 0)))  # (8, 128, H)

    if tb is None:
        tb = _pick_batch_tile(B)
    grid = (pl.cdiv(B, tb),)

    # Rough VMEM footprint (bytes): double-buffered x + out tiles, resident
    # weights (double-buffered worst case), live activation tiles.
    est = 4 * (2 * tb * H + 2 * tb * H
               + 2 * 2 * NUM_LAYERS * INNER_PAD * H
               + tb * H + tb * INNER_PAD)
    vmem_limit = None
    if est > (32 << 20):
        vmem_limit = min(int(est * 3 // 2), 100 << 20)

    return pl.pallas_call(
        eight_mlp_kernel,
        out_shape=jax.ShapeDtypeStruct((B, H), jnp.float32),
        grid=grid,
        in_specs=[
            pl.BlockSpec((tb, H), lambda i: (i, 0)),                           # x: streamed
            pl.BlockSpec((NUM_LAYERS, H, INNER_PAD), lambda i: (0, 0, 0)),     # w1: resident
            pl.BlockSpec((NUM_LAYERS, INNER_PAD, H), lambda i: (0, 0, 0)),     # w2: resident
        ],
        out_specs=pl.BlockSpec((tb, H), lambda i: (i, 0)),
        input_output_aliases={0: 0},  # out reuses x's HBM buffer
        compiler_params=pltpu.CompilerParams(
            dimension_semantics=("parallel",),
            vmem_limit_bytes=vmem_limit,
        ),
    )(x, w1, w2)


def make_params(hidden):
    # Deterministic parameter init, exactly as in the PyTorch __init__:
    #   mlp_k.fc1.weight = k-1   (values 0..7);  mlp_k.fc2.weight = 2*(k-1)
    fc1_w = jnp.stack(
        [jnp.full((INNER, hidden), float(v), dtype=jnp.float32)
         for v in range(NUM_LAYERS)]
    )  # (8, 16, H) -- PyTorch (out, in) layout
    fc2_w = jnp.stack(
        [jnp.full((hidden, INNER), float(2 * v), dtype=jnp.float32)
         for v in range(NUM_LAYERS)]
    )  # (8, H, 16)
    return fc1_w, fc2_w


def reference_forward(x, fc1_w, fc2_w):
    # Pure-JAX mirror of the PyTorch module (weights in PyTorch layout).
    x = x + x
    for i in range(NUM_LAYERS):
        t = x @ fc1_w[i].T
        t = _gelu_exact(t)
        x = t @ fc2_w[i].T
        if i in (0, 1):
            x = x * 2.0
    x = x * 2.0
    x = x * 4.0
    x = x + 4.0
    return x


if __name__ == "__main__":
    batch, hidden = 8, 64  # small shapes; hidden=64 matches the module default
    key = jax.random.PRNGKey(0)
    kx, kw1, kw2 = jax.random.split(key, 3)
    x = jax.random.normal(kx, (batch, hidden), dtype=jnp.float32)

    # (1) exact module weights (constant fills, as in the PyTorch __init__)
    fc1_w, fc2_w = make_params(hidden)
    out = jax.block_until_ready(eight_mlp_with_ops_tail(x, fc1_w, fc2_w))
    ref = reference_forward(x, fc1_w, fc2_w)
    assert out.shape == (batch, hidden)
    assert jnp.allclose(out, ref, atol=1e-4, rtol=1e-4)

    # (2) random weights to exercise the layouts (catches transpose/padding
    #     bugs that constant-valued weights would mask)
    fc1_r = 0.1 * jax.random.normal(kw1, (NUM_LAYERS, INNER, hidden), jnp.float32)
    fc2_r = 0.1 * jax.random.normal(kw2, (NUM_LAYERS, hidden, INNER), jnp.float32)
    out_r = jax.block_until_ready(eight_mlp_with_ops_tail(x, fc1_r, fc2_r))
    ref_r = reference_forward(x, fc1_r, fc2_r)
    assert jnp.allclose(out_r, ref_r, atol=1e-3, rtol=1e-3)

    print("KERNEL_OK")
</pallas_src>

<mosaic_0001>
module attributes {stable_mosaic.version = 11 : i64} {
  func.func @eight_mlp_kernel(%arg0: i32, %arg1: memref<8x64xf32, #tpu.memory_space<vmem>>, %arg2: memref<8x64x128xf32, #tpu.memory_space<vmem>>, %arg3: memref<8x128x64xf32, #tpu.memory_space<vmem>>, %arg4: memref<8x64xf32, #tpu.memory_space<vmem>>) attributes {dimension_semantics = [#tpu.dimension_semantics<parallel>], iteration_bounds = array<i64: 1>, scalar_prefetch = 0 : i64, scratch_operands = 0 : i64, tpu.core_type = #tpu.core_type<tc>, window_params = [{transform_indices = @transform_0, window_bounds = array<i64: 8, 64>}, {pipeline_mode = #tpu.pipeline_mode<synchronous>, transform_indices = @transform_1, window_bounds = array<i64: 8, 64, 128>}, {pipeline_mode = #tpu.pipeline_mode<synchronous>, transform_indices = @transform_2, window_bounds = array<i64: 8, 128, 64>}, {transform_indices = @transform_3, window_bounds = array<i64: 8, 64>}]} {
    %c0 = arith.constant 0 : index
    %c0_0 = arith.constant 0 : index
    %0 = vector.load %arg1[%c0, %c0_0] : memref<8x64xf32, #tpu.memory_space<vmem>>, vector<8x64xf32>
    %1 = arith.addf %0, %0 : vector<8x64xf32>
    %c0_1 = arith.constant 0 : index
    %c0_2 = arith.constant 0 : index
    %c0_3 = arith.constant 0 : index
    %2 = vector.load %arg2[%c0_1, %c0_2, %c0_3] : memref<8x64x128xf32, #tpu.memory_space<vmem>>, vector<1x64x128xf32>
    %3 = vector.shape_cast %2 : vector<1x64x128xf32> to vector<64x128xf32>
    %cst = arith.constant dense<0.000000e+00> : vector<8x128xf32>
    %4 = tpu.matmul %1, %3, %cst {dimension_numbers = #tpu.dot_dimension_numbers<[1], [0], [0], [1], [0, 0, 1, 1], [], []>} : vector<8x64xf32>, vector<64x128xf32>, vector<8x128xf32> -> vector<8x128xf32>
    %cst_4 = arith.constant 5.000000e-01 : f32
    %5 = vector.broadcast %cst_4 : f32 to vector<8x128xf32>
    %6 = arith.mulf %5, %4 : vector<8x128xf32>
    %cst_5 = arith.constant 0.707106769 : f32
    %7 = vector.broadcast %cst_5 : f32 to vector<8x128xf32>
    %8 = arith.mulf %4, %7 : vector<8x128xf32>
    %9 = math.erf %8 : vector<8x128xf32>
    %cst_6 = arith.constant 1.000000e+00 : f32
    %10 = vector.broadcast %cst_6 : f32 to vector<8x128xf32>
    %11 = arith.addf %10, %9 : vector<8x128xf32>
    %12 = arith.mulf %6, %11 : vector<8x128xf32>
    %c0_7 = arith.constant 0 : index
    %c0_8 = arith.constant 0 : index
    %c0_9 = arith.constant 0 : index
    %13 = vector.load %arg3[%c0_7, %c0_8, %c0_9] : memref<8x128x64xf32, #tpu.memory_space<vmem>>, vector<1x128x64xf32>
    %14 = vector.shape_cast %13 : vector<1x128x64xf32> to vector<128x64xf32>
    %cst_10 = arith.constant dense<0.000000e+00> : vector<8x64xf32>
    %15 = tpu.matmul %12, %14, %cst_10 {dimension_numbers = #tpu.dot_dimension_numbers<[1], [0], [0], [1], [0, 0, 1, 1], [], []>} : vector<8x128xf32>, vector<128x64xf32>, vector<8x64xf32> -> vector<8x64xf32>
    %cst_11 = arith.constant 2.000000e+00 : f32
    %16 = vector.broadcast %cst_11 : f32 to vector<8x64xf32>
    %17 = arith.mulf %15, %16 : vector<8x64xf32>
    %c1 = arith.constant 1 : index
    %c0_12 = arith.constant 0 : index
    %c0_13 = arith.constant 0 : index
    %18 = vector.load %arg2[%c1, %c0_12, %c0_13] : memref<8x64x128xf32, #tpu.memory_space<vmem>>, vector<1x64x128xf32>
    %19 = vector.shape_cast %18 : vector<1x64x128xf32> to vector<64x128xf32>
    %cst_14 = arith.constant dense<0.000000e+00> : vector<8x128xf32>
    %20 = tpu.matmul %17, %19, %cst_14 {dimension_numbers = #tpu.dot_dimension_numbers<[1], [0], [0], [1], [0, 0, 1, 1], [], []>} : vector<8x64xf32>, vector<64x128xf32>, vector<8x128xf32> -> vector<8x128xf32>
    %cst_15 = arith.constant 5.000000e-01 : f32
    %21 = vector.broadcast %cst_15 : f32 to vector<8x128xf32>
    %22 = arith.mulf %21, %20 : vector<8x128xf32>
    %cst_16 = arith.constant 0.707106769 : f32
    %23 = vector.broadcast %cst_16 : f32 to vector<8x128xf32>
    %24 = arith.mulf %20, %23 : vector<8x128xf32>
    %25 = math.erf %24 : vector<8x128xf32>
    %cst_17 = arith.constant 1.000000e+00 : f32
    %26 = vector.broadcast %cst_17 : f32 to vector<8x128xf32>
    %27 = arith.addf %26, %25 : vector<8x128xf32>
    %28 = arith.mulf %22, %27 : vector<8x128xf32>
    %c1_18 = arith.constant 1 : index
    %c0_19 = arith.constant 0 : index
    %c0_20 = arith.constant 0 : index
    %29 = vector.load %arg3[%c1_18, %c0_19, %c0_20] : memref<8x128x64xf32, #tpu.memory_space<vmem>>, vector<1x128x64xf32>
    %30 = vector.shape_cast %29 : vector<1x128x64xf32> to vector<128x64xf32>
    %cst_21 = arith.constant dense<0.000000e+00> : vector<8x64xf32>
    %31 = tpu.matmul %28, %30, %cst_21 {dimension_numbers = #tpu.dot_dimension_numbers<[1], [0], [0], [1], [0, 0, 1, 1], [], []>} : vector<8x128xf32>, vector<128x64xf32>, vector<8x64xf32> -> vector<8x64xf32>
    %cst_22 = arith.constant 2.000000e+00 : f32
    %32 = vector.broadcast %cst_22 : f32 to vector<8x64xf32>
    %33 = arith.mulf %31, %32 : vector<8x64xf32>
    %c2 = arith.constant 2 : index
    %c0_23 = arith.constant 0 : index
    %c0_24 = arith.constant 0 : index
    %34 = vector.load %arg2[%c2, %c0_23, %c0_24] : memref<8x64x128xf32, #tpu.memory_space<vmem>>, vector<1x64x128xf32>
    %35 = vector.shape_cast %34 : vector<1x64x128xf32> to vector<64x128xf32>
    %cst_25 = arith.constant dense<0.000000e+00> : vector<8x128xf32>
    %36 = tpu.matmul %33, %35, %cst_25 {dimension_numbers = #tpu.dot_dimension_numbers<[1], [0], [0], [1], [0, 0, 1, 1], [], []>} : vector<8x64xf32>, vector<64x128xf32>, vector<8x128xf32> -> vector<8x128xf32>
    %cst_26 = arith.constant 5.000000e-01 : f32
    %37 = vector.broadcast %cst_26 : f32 to vector<8x128xf32>
    %38 = arith.mulf %37, %36 : vector<8x128xf32>
    %cst_27 = arith.constant 0.707106769 : f32
    %39 = vector.broadcast %cst_27 : f32 to vector<8x128xf32>
    %40 = arith.mulf %36, %39 : vector<8x128xf32>
    %41 = math.erf %40 : vector<8x128xf32>
    %cst_28 = arith.constant 1.000000e+00 : f32
    %42 = vector.broadcast %cst_28 : f32 to vector<8x128xf32>
    %43 = arith.addf %42, %41 : vector<8x128xf32>
    %44 = arith.mulf %38, %43 : vector<8x128xf32>
    %c2_29 = arith.constant 2 : index
    %c0_30 = arith.constant 0 : index
    %c0_31 = arith.constant 0 : index
    %45 = vector.load %arg3[%c2_29, %c0_30, %c0_31] : memref<8x128x64xf32, #tpu.memory_space<vmem>>, vector<1x128x64xf32>
    %46 = vector.shape_cast %45 : vector<1x128x64xf32> to vector<128x64xf32>
    %cst_32 = arith.constant dense<0.000000e+00> : vector<8x64xf32>
    %47 = tpu.matmul %44, %46, %cst_32 {dimension_numbers = #tpu.dot_dimension_numbers<[1], [0], [0], [1], [0, 0, 1, 1], [], []>} : vector<8x128xf32>, vector<128x64xf32>, vector<8x64xf32> -> vector<8x64xf32>
    %c3 = arith.constant 3 : index
    %c0_33 = arith.constant 0 : index
    %c0_34 = arith.constant 0 : index
    %48 = vector.load %arg2[%c3, %c0_33, %c0_34] : memref<8x64x128xf32, #tpu.memory_space<vmem>>, vector<1x64x128xf32>
    %49 = vector.shape_cast %48 : vector<1x64x128xf32> to vector<64x128xf32>
    %cst_35 = arith.constant dense<0.000000e+00> : vector<8x128xf32>
    %50 = tpu.matmul %47, %49, %cst_35 {dimension_numbers = #tpu.dot_dimension_numbers<[1], [0], [0], [1], [0, 0, 1, 1], [], []>} : vector<8x64xf32>, vector<64x128xf32>, vector<8x128xf32> -> vector<8x128xf32>
    %cst_36 = arith.constant 5.000000e-01 : f32
    %51 = vector.broadcast %cst_36 : f32 to vector<8x128xf32>
    %52 = arith.mulf %51, %50 : vector<8x128xf32>
    %cst_37 = arith.constant 0.707106769 : f32
    %53 = vector.broadcast %cst_37 : f32 to vector<8x128xf32>
    %54 = arith.mulf %50, %53 : vector<8x128xf32>
    %55 = math.erf %54 : vector<8x128xf32>
    %cst_38 = arith.constant 1.000000e+00 : f32
    %56 = vector.broadcast %cst_38 : f32 to vector<8x128xf32>
    %57 = arith.addf %56, %55 : vector<8x128xf32>
    %58 = arith.mulf %52, %57 : vector<8x128xf32>
    %c3_39 = arith.constant 3 : index
    %c0_40 = arith.constant 0 : index
    %c0_41 = arith.constant 0 : index
    %59 = vector.load %arg3[%c3_39, %c0_40, %c0_41] : memref<8x128x64xf32, #tpu.memory_space<vmem>>, vector<1x128x64xf32>
    %60 = vector.shape_cast %59 : vector<1x128x64xf32> to vector<128x64xf32>
    %cst_42 = arith.constant dense<0.000000e+00> : vector<8x64xf32>
    %61 = tpu.matmul %58, %60, %cst_42 {dimension_numbers = #tpu.dot_dimension_numbers<[1], [0], [0], [1], [0, 0, 1, 1], [], []>} : vector<8x128xf32>, vector<128x64xf32>, vector<8x64xf32> -> vector<8x64xf32>
    %c4 = arith.constant 4 : index
    %c0_43 = arith.constant 0 : index
    %c0_44 = arith.constant 0 : index
    %62 = vector.load %arg2[%c4, %c0_43, %c0_44] : memref<8x64x128xf32, #tpu.memory_space<vmem>>, vector<1x64x128xf32>
    %63 = vector.shape_cast %62 : vector<1x64x128xf32> to vector<64x128xf32>
    %cst_45 = arith.constant dense<0.000000e+00> : vector<8x128xf32>
    %64 = tpu.matmul %61, %63, %cst_45 {dimension_numbers = #tpu.dot_dimension_numbers<[1], [0], [0], [1], [0, 0, 1, 1], [], []>} : vector<8x64xf32>, vector<64x128xf32>, vector<8x128xf32> -> vector<8x128xf32>
    %cst_46 = arith.constant 5.000000e-01 : f32
    %65 = vector.broadcast %cst_46 : f32 to vector<8x128xf32>
    %66 = arith.mulf %65, %64 : vector<8x128xf32>
    %cst_47 = arith.constant 0.707106769 : f32
    %67 = vector.broadcast %cst_47 : f32 to vector<8x128xf32>
    %68 = arith.mulf %64, %67 : vector<8x128xf32>
    %69 = math.erf %68 : vector<8x128xf32>
    %cst_48 = arith.constant 1.000000e+00 : f32
    %70 = vector.broadcast %cst_48 : f32 to vector<8x128xf32>
    %71 = arith.addf %70, %69 : vector<8x128xf32>
    %72 = arith.mulf %66, %71 : vector<8x128xf32>
    %c4_49 = arith.constant 4 : index
    %c0_50 = arith.constant 0 : index
    %c0_51 = arith.constant 0 : index
    %73 = vector.load %arg3[%c4_49, %c0_50, %c0_51] : memref<8x128x64xf32, #tpu.memory_space<vmem>>, vector<1x128x64xf32>
    %74 = vector.shape_cast %73 : vector<1x128x64xf32> to vector<128x64xf32>
    %cst_52 = arith.constant dense<0.000000e+00> : vector<8x64xf32>
    %75 = tpu.matmul %72, %74, %cst_52 {dimension_numbers = #tpu.dot_dimension_numbers<[1], [0], [0], [1], [0, 0, 1, 1], [], []>} : vector<8x128xf32>, vector<128x64xf32>, vector<8x64xf32> -> vector<8x64xf32>
    %c5 = arith.constant 5 : index
    %c0_53 = arith.constant 0 : index
    %c0_54 = arith.constant 0 : index
    %76 = vector.load %arg2[%c5, %c0_53, %c0_54] : memref<8x64x128xf32, #tpu.memory_space<vmem>>, vector<1x64x128xf32>
    %77 = vector.shape_cast %76 : vector<1x64x128xf32> to vector<64x128xf32>
    %cst_55 = arith.constant dense<0.000000e+00> : vector<8x128xf32>
    %78 = tpu.matmul %75, %77, %cst_55 {dimension_numbers = #tpu.dot_dimension_numbers<[1], [0], [0], [1], [0, 0, 1, 1], [], []>} : vector<8x64xf32>, vector<64x128xf32>, vector<8x128xf32> -> vector<8x128xf32>
    %cst_56 = arith.constant 5.000000e-01 : f32
    %79 = vector.broadcast %cst_56 : f32 to vector<8x128xf32>
    %80 = arith.mulf %79, %78 : vector<8x128xf32>
    %cst_57 = arith.constant 0.707106769 : f32
    %81 = vector.broadcast %cst_57 : f32 to vector<8x128xf32>
    %82 = arith.mulf %78, %81 : vector<8x128xf32>
    %83 = math.erf %82 : vector<8x128xf32>
    %cst_58 = arith.constant 1.000000e+00 : f32
    %84 = vector.broadcast %cst_58 : f32 to vector<8x128xf32>
    %85 = arith.addf %84, %83 : vector<8x128xf32>
    %86 = arith.mulf %80, %85 : vector<8x128xf32>
    %c5_59 = arith.constant 5 : index
    %c0_60 = arith.constant 0 : index
    %c0_61 = arith.constant 0 : index
    %87 = vector.load %arg3[%c5_59, %c0_60, %c0_61] : memref<8x128x64xf32, #tpu.memory_space<vmem>>, vector<1x128x64xf32>
    %88 = vector.shape_cast %87 : vector<1x128x64xf32> to vector<128x64xf32>
    %cst_62 = arith.constant dense<0.000000e+00> : vector<8x64xf32>
    %89 = tpu.matmul %86, %88, %cst_62 {dimension_numbers = #tpu.dot_dimension_numbers<[1], [0], [0], [1], [0, 0, 1, 1], [], []>} : vector<8x128xf32>, vector<128x64xf32>, vector<8x64xf32> -> vector<8x64xf32>
    %c6 = arith.constant 6 : index
    %c0_63 = arith.constant 0 : index
    %c0_64 = arith.constant 0 : index
    %90 = vector.load %arg2[%c6, %c0_63, %c0_64] : memref<8x64x128xf32, #tpu.memory_space<vmem>>, vector<1x64x128xf32>
    %91 = vector.shape_cast %90 : vector<1x64x128xf32> to vector<64x128xf32>
    %cst_65 = arith.constant dense<0.000000e+00> : vector<8x128xf32>
    %92 = tpu.matmul %89, %91, %cst_65 {dimension_numbers = #tpu.dot_dimension_numbers<[1], [0], [0], [1], [0, 0, 1, 1], [], []>} : vector<8x64xf32>, vector<64x128xf32>, vector<8x128xf32> -> vector<8x128xf32>
    %cst_66 = arith.constant 5.000000e-01 : f32
    %93 = vector.broadcast %cst_66 : f32 to vector<8x128xf32>
    %94 = arith.mulf %93, %92 : vector<8x128xf32>
    %cst_67 = arith.constant 0.707106769 : f32
    %95 = vector.broadcast %cst_67 : f32 to vector<8x128xf32>
    %96 = arith.mulf %92, %95 : vector<8x128xf32>
    %97 = math.erf %96 : vector<8x128xf32>
    %cst_68 = arith.constant 1.000000e+00 : f32
    %98 = vector.broadcast %cst_68 : f32 to vector<8x128xf32>
    %99 = arith.addf %98, %97 : vector<8x128xf32>
    %100 = arith.mulf %94, %99 : vector<8x128xf32>
    %c6_69 = arith.constant 6 : index
    %c0_70 = arith.constant 0 : index
    %c0_71 = arith.constant 0 : index
    %101 = vector.load %arg3[%c6_69, %c0_70, %c0_71] : memref<8x128x64xf32, #tpu.memory_space<vmem>>, vector<1x128x64xf32>
    %102 = vector.shape_cast %101 : vector<1x128x64xf32> to vector<128x64xf32>
    %cst_72 = arith.constant dense<0.000000e+00> : vector<8x64xf32>
    %103 = tpu.matmul %100, %102, %cst_72 {dimension_numbers = #tpu.dot_dimension_numbers<[1], [0], [0], [1], [0, 0, 1, 1], [], []>} : vector<8x128xf32>, vector<128x64xf32>, vector<8x64xf32> -> vector<8x64xf32>
    %c7 = arith.constant 7 : index
    %c0_73 = arith.constant 0 : index
    %c0_74 = arith.constant 0 : index
    %104 = vector.load %arg2[%c7, %c0_73, %c0_74] : memref<8x64x128xf32, #tpu.memory_space<vmem>>, vector<1x64x128xf32>
    %105 = vector.shape_cast %104 : vector<1x64x128xf32> to vector<64x128xf32>
    %cst_75 = arith.constant dense<0.000000e+00> : vector<8x128xf32>
    %106 = tpu.matmul %103, %105, %cst_75 {dimension_numbers = #tpu.dot_dimension_numbers<[1], [0], [0], [1], [0, 0, 1, 1], [], []>} : vector<8x64xf32>, vector<64x128xf32>, vector<8x128xf32> -> vector<8x128xf32>
    %cst_76 = arith.constant 5.000000e-01 : f32
    %107 = vector.broadcast %cst_76 : f32 to vector<8x128xf32>
    %108 = arith.mulf %107, %106 : vector<8x128xf32>
    %cst_77 = arith.constant 0.707106769 : f32
    %109 = vector.broadcast %cst_77 : f32 to vector<8x128xf32>
    %110 = arith.mulf %106, %109 : vector<8x128xf32>
    %111 = math.erf %110 : vector<8x128xf32>
    %cst_78 = arith.constant 1.000000e+00 : f32
    %112 = vector.broadcast %cst_78 : f32 to vector<8x128xf32>
    %113 = arith.addf %112, %111 : vector<8x128xf32>
    %114 = arith.mulf %108, %113 : vector<8x128xf32>
    %c7_79 = arith.constant 7 : index
    %c0_80 = arith.constant 0 : index
    %c0_81 = arith.constant 0 : index
    %115 = vector.load %arg3[%c7_79, %c0_80, %c0_81] : memref<8x128x64xf32, #tpu.memory_space<vmem>>, vector<1x128x64xf32>
    %116 = vector.shape_cast %115 : vector<1x128x64xf32> to vector<128x64xf32>
    %cst_82 = arith.constant dense<0.000000e+00> : vector<8x64xf32>
    %117 = tpu.matmul %114, %116, %cst_82 {dimension_numbers = #tpu.dot_dimension_numbers<[1], [0], [0], [1], [0, 0, 1, 1], [], []>} : vector<8x128xf32>, vector<128x64xf32>, vector<8x64xf32> -> vector<8x64xf32>
    %cst_83 = arith.constant 8.000000e+00 : f32
    %118 = vector.broadcast %cst_83 : f32 to vector<8x64xf32>
    %119 = arith.mulf %117, %118 : vector<8x64xf32>
    %cst_84 = arith.constant 4.000000e+00 : f32
    %120 = vector.broadcast %cst_84 : f32 to vector<8x64xf32>
    %121 = arith.addf %119, %120 : vector<8x64xf32>
    %c0_85 = arith.constant 0 : index
    %c0_86 = arith.constant 0 : index
    %122 = vector.load %arg4[%c0_85, %c0_86] : memref<8x64xf32, #tpu.memory_space<vmem>>, vector<8x64xf32>
    tpu.vector_store %arg4[%c0_85, %c0_86], %121 {strides = array<i32>} : memref<8x64xf32, #tpu.memory_space<vmem>>, vector<8x64xf32>,
    return
  }
  func.func @transform_0(%arg0: i32) -> (i32, i32) {
    %c0_i32 = arith.constant 0 : i32
    %c0_i32_0 = arith.constant 0 : i32
    return %arg0, %c0_i32 : i32, i32
  }
  func.func @transform_1(%arg0: i32) -> (i32, i32, i32) {
    %c0_i32 = arith.constant 0 : i32
    %c0_i32_0 = arith.constant 0 : i32
    %c0_i32_1 = arith.constant 0 : i32
    %c0_i32_2 = arith.constant 0 : i32
    return %c0_i32, %c0_i32_0, %c0_i32_1 : i32, i32, i32
  }
  func.func @transform_2(%arg0: i32) -> (i32, i32, i32) {
    %c0_i32 = arith.constant 0 : i32
    %c0_i32_0 = arith.constant 0 : i32
    %c0_i32_1 = arith.constant 0 : i32
    %c0_i32_2 = arith.constant 0 : i32
    return %c0_i32, %c0_i32_0, %c0_i32_1 : i32, i32, i32
  }
  func.func @transform_3(%arg0: i32) -> (i32, i32) {
    %c0_i32 = arith.constant 0 : i32
    %c0_i32_0 = arith.constant 0 : i32
    return %arg0, %c0_i32 : i32, i32
  }
}

</mosaic_0001>

<llo_original>
// kernel: tpu_custom_call.1
$region0: #{tpu_custom_call.1}
  #allocation0 [shape = 'u32[]', space=smem, size = 0x4, offset = 0x4, fixed_abs, tag = 'smem constant byte address 0x4 - core index']
  #allocation1 [shape = 'u32[144,128]{1,0:T(1,128)}', space=vmem, size = 0x12000, scoped, tag = 'internal scratch']
  %s0 = inlined_call_operand.hbm [shape: f32[8,64], index: 0, kind: input, shape index: {}, may-alias: {0,3}]
  %s1 = inlined_call_operand.vmem [shape: f32[8,64,128], index: 1, kind: input, shape index: {}]
  %s2 = inlined_call_operand.vmem [shape: f32[8,128,64], index: 2, kind: input, shape index: {}]
  %s3 = inlined_call_operand.hbm [shape: f32[8,64], index: 3, kind: output, shape index: {}, may-alias: {0,3}]
  %s4 = sld [smem:[#allocation0]]
  $region26: #{tpu_custom_call.1} parent=0
    _
  %s6 = ssub.s32 1, %s4
  %s7 = scalar_select 0, %s6, %s4
  $region1: #{tpu_custom_call.1} parent=0
    #allocation2 [shape = 'u8[4096]{0}', space=vmem, size = 0x1000, scoped, tag = 'input window, operand 0, single buffered']
    #allocation3 [shape = 's32[1]{0}', space=sflag, size = 0x4, scoped, tag = 'scoped memory for tpu_custom_call.1']
    #allocation4 [shape = 's32[1]{0}', space=sflag, size = 0x4, scoped, tag = 'scoped memory for tpu_custom_call.1']
    #allocation5 [shape = 'u8[4096]{0}', space=vmem, size = 0x1000, scoped, tag = 'output window, operand 0, single buffered']
    %8 = vsyncpa [#allocation3], 0
    %9 = vsyncpa [#allocation4], 0
    // Predicated region
    $region2: #{tpu_custom_call.1} parent=1 // pred_check
      _
    $region3: #{tpu_custom_call.1} parent=1 // pred_check_branch
      %11 = sbr.rel (0) target = $region5
    $region4: #{tpu_custom_call.1} parent=1 // pred_region
      %s13 = ssub.s32 128, 128
      %14 = vsyncadd [#allocation3], %s13
      %s16 = sshll.u32 [#allocation2], 4
      %s17 = int_to_ptr.vmem [resolvable:$true] %s16
      %19 = dma.hbm_to_vmem [thread:$0]  %s0, 128, %s17, [#allocation3]
    $region5: #{tpu_custom_call.1} parent=1 // pred_fallthru
      _
    // Predicated region
    $region6: #{tpu_custom_call.1} parent=1 // pred_check
      _
    $region7: #{tpu_custom_call.1} parent=1 // pred_check_branch
      %21 = sbr.rel (0) target = $region9
    $region8: #{tpu_custom_call.1} parent=1 // pred_region
      _
    $region9: #{tpu_custom_call.1} parent=1 // pred_fallthru
      _
    // Predicated region
    $region10: #{tpu_custom_call.1} parent=1 // pred_check
      _
    $region11: #{tpu_custom_call.1} parent=1 // pred_check_branch
      %23 = sbr.rel (0) target = $region13
    $region12: #{tpu_custom_call.1} parent=1 // pred_region
      _
    $region13: #{tpu_custom_call.1} parent=1 // pred_fallthru
      _
    // Predicated region
    $region14: #{tpu_custom_call.1} parent=1 // pred_check
      _
    $region15: #{tpu_custom_call.1} parent=1 // pred_check_branch
      %25 = sbr.rel (0) target = $region17
    $region16: #{tpu_custom_call.1} parent=1 // pred_region
      %26 = dma.done [#allocation3], 128
    $region17: #{tpu_custom_call.1} parent=1 // pred_fallthru
      _
    %v27 = vld [vmem:[#allocation2] sm:$0xff]
    %v28 = vadd.f32 %v27, %v27
    %v29 = vld [vmem:[%s1] sm:$0xff]
    %v30 = vld [vmem:[%s1 + $0x8] sm:$0xff]
    %v31 = vld [vmem:[%s1 + $0x10] sm:$0xff]
    %v32 = vld [vmem:[%s1 + $0x18] sm:$0xff]
    %v33 = vld [vmem:[%s1 + $0x20] sm:$0xff]
    %v34 = vld [vmem:[%s1 + $0x28] sm:$0xff]
    %v35 = vld [vmem:[%s1 + $0x30] sm:$0xff]
    %v36 = vld [vmem:[%s1 + $0x38] sm:$0xff]
    %vm37 = vcmask 523264
    %v39 = vsel %vm37, %v28, 0
    %41 = vmatprep.subr.mxu0 0.0
    %42 = vmatpush1.msra.mxu0 %v29
    %43 = vmatprep.subr.mxu0 0.0
    %44 = vmatpush1.msra.mxu0 %v30
    %45 = vmatprep.subr.mxu0 0.0
    %46 = vmatpush1.msra.mxu0 %v31
    %47 = vmatprep.subr.mxu0 0.0
    %48 = vmatpush1.msra.mxu0 %v32
    %49 = vmatprep.subr.mxu0 0.0
    %50 = vmatpush1.msra.mxu0 %v33
    %51 = vmatprep.subr.mxu0 0.0
    %52 = vmatpush1.msra.mxu0 %v34
    %53 = vmatprep.subr.mxu0 0.0
    %54 = vmatpush1.msra.mxu0 %v35
    %55 = vmatprep.subr.mxu0 0.0
    %56 = vmatpush1.msra.mxu0 %v36
    %57 = vmatprep.subr.mxu0 0.0
    %58 = vmatpush1.msra.mxu0 0.0
    %59 = vmatprep.subr.mxu0 0.0
    %60 = vmatpush1.msra.mxu0 0.0
    %61 = vmatprep.subr.mxu0 0.0
    %62 = vmatpush1.msra.mxu0 0.0
    %63 = vmatprep.subr.mxu0 0.0
    %64 = vmatpush1.msra.mxu0 0.0
    %65 = vmatprep.subr.mxu0 0.0
    %66 = vmatpush1.msra.mxu0 0.0
    %67 = vmatprep.subr.mxu0 0.0
    %68 = vmatpush1.msra.mxu0 0.0
    %69 = vmatprep.subr.mxu0 0.0
    %70 = vmatpush1.msra.mxu0 0.0
    %71 = vmatprep.subr.mxu0 0.0
    %72 = vmatpush1.msra.mxu0 0.0
    %73 = vmatprep.subr.mxu0 0.0
    %74 = vmatpush1.msra.mxu0 0.0
    %75 = vmatprep.subr.mxu0 0.0
    %76 = vmatpush1.msra.mxu0 0.0
    %77 = vmatprep.subr.mxu0 0.0
    %78 = vmatpush1.msra.mxu0 0.0
    %79 = vmatprep.subr.mxu0 0.0
    %80 = vmatpush1.msra.mxu0 0.0
    %81 = vmatprep.subr.mxu0 0.0
    %82 = vmatpush1.msra.mxu0 0.0
    %83 = vmatprep.subr.mxu0 0.0
    %84 = vmatpush1.msra.mxu0 0.0
    %85 = vmatprep.subr.mxu0 0.0
    %86 = vmatpush1.msra.mxu0 0.0
    %87 = vmatprep.subr.mxu0 0.0
    %88 = vmatpush1.msra.mxu0 0.0
    %89 = vmatprep.subr.mxu0 0.0
    %90 = vmatpush1.msra.mxu0 0.0
    %91 = vmatprep.subr.mxu0 0.0
    %92 = vmatpush1.msra.mxu0 0.0
    %93 = vmatprep.subr.mxu0 0.0
    %94 = vmatpush1.msra.mxu0 0.0
    %95 = vmatprep.subr.mxu0 0.0
    %96 = vmatpush1.msra.mxu0 0.0
    %97 = vmatprep.subr.mxu0 0.0
    %98 = vmatpush1.msra.mxu0 0.0
    %99 = vmatprep.subr.mxu0 0.0
    %100 = vmatpush1.msra.mxu0 0.0
    %101 = vmatprep.subr.mxu0 0.0
    %102 = vmatpush1.msra.mxu0 0.0
    %103 = vmatprep.subr.mxu0 0.0
    %104 = vmatpush1.msra.mxu0 0.0
    %105 = vmatprep.mubr.f32.mxu0 0.0
    %106 = vmatmul.mubr.f32.gmra.mrb[0].mxu0 %v39
    %v107 = vpop.f32.mrb[0].mxu0
    %v108 = vadd.f32 0.0, %v107
    %v109 = vpop.f32.mrb[0].mxu0
    %110 = vdwg.mxu0
    %v111 = vmul.f32 %v108, 0.5
    %v112 = vmul.f32 %v108, 0.70710677
    %v113 = verf.f32.pop %v112
    %v114 = vadd.f32 %v113, 1.0
    %v115 = vmul.f32 %v111, %v114
    %v116 = vld [vmem:[%s2] sm:$0xff]
    %v117 = vld [vmem:[%s2 + $0x8] sm:$0xff]
    %v118 = vld [vmem:[%s2 + $0x10] sm:$0xff]
    %v119 = vld [vmem:[%s2 + $0x18] sm:$0xff]
    %v120 = vld [vmem:[%s2 + $0x20] sm:$0xff]
    %v121 = vld [vmem:[%s2 + $0x28] sm:$0xff]
    %v122 = vld [vmem:[%s2 + $0x30] sm:$0xff]
    %v123 = vld [vmem:[%s2 + $0x38] sm:$0xff]
    %v124 = vld [vmem:[%s2 + $0x40] sm:$0xff]
    %v125 = vld [vmem:[%s2 + $0x48] sm:$0xff]
    %v126 = vld [vmem:[%s2 + $0x50] sm:$0xff]
    %v127 = vld [vmem:[%s2 + $0x58] sm:$0xff]
    %v128 = vld [vmem:[%s2 + $0x60] sm:$0xff]
    %v129 = vld [vmem:[%s2 + $0x68] sm:$0xff]
    %v130 = vld [vmem:[%s2 + $0x70] sm:$0xff]
    %v131 = vld [vmem:[%s2 + $0x78] sm:$0xff]
    %132 = vmatprep.subr.mxu0 0.0
    %133 = vmatpush1.msra.mxu0 %v116
    %134 = vmatprep.subr.mxu0 0.0
    %135 = vmatpush1.msra.mxu0 %v117
    %136 = vmatprep.subr.mxu0 0.0
    %137 = vmatpush1.msra.mxu0 %v118
    %138 = vmatprep.subr.mxu0 0.0
    %139 = vmatpush1.msra.mxu0 %v119
    %140 = vmatprep.subr.mxu0 0.0
    %141 = vmatpush1.msra.mxu0 %v120
    %142 = vmatprep.subr.mxu0 0.0
    %143 = vmatpush1.msra.mxu0 %v121
    %144 = vmatprep.subr.mxu0 0.0
    %145 = vmatpush1.msra.mxu0 %v122
    %146 = vmatprep.subr.mxu0 0.0
    %147 = vmatpush1.msra.mxu0 %v123
    %148 = vmatprep.subr.mxu0 0.0
    %149 = vmatpush1.msra.mxu0 %v124
    %150 = vmatprep.subr.mxu0 0.0
    %151 = vmatpush1.msra.mxu0 %v125
    %152 = vmatprep.subr.mxu0 0.0
    %153 = vmatpush1.msra.mxu0 %v126
    %154 = vmatprep.subr.mxu0 0.0
    %155 = vmatpush1.msra.mxu0 %v127
    %156 = vmatprep.subr.mxu0 0.0
    %157 = vmatpush1.msra.mxu0 %v128
    %158 = vmatprep.subr.mxu0 0.0
    %159 = vmatpush1.msra.mxu0 %v129
    %160 = vmatprep.subr.mxu0 0.0
    %161 = vmatpush1.msra.mxu0 %v130
    %162 = vmatprep.subr.mxu0 0.0
    %163 = vmatpush1.msra.mxu0 %v131
    %164 = vmatprep.subr.mxu0 0.0
    %165 = vmatpush1.msra.mxu0 0.0
    %166 = vmatprep.subr.mxu0 0.0
    %167 = vmatpush1.msra.mxu0 0.0
    %168 = vmatprep.subr.mxu0 0.0
    %169 = vmatpush1.msra.mxu0 0.0
    %170 = vmatprep.subr.mxu0 0.0
    %171 = vmatpush1.msra.mxu0 0.0
    %172 = vmatprep.subr.mxu0 0.0
    %173 = vmatpush1.msra.mxu0 0.0
    %174 = vmatprep.subr.mxu0 0.0
    %175 = vmatpush1.msra.mxu0 0.0
    %176 = vmatprep.subr.mxu0 0.0
    %177 = vmatpush1.msra.mxu0 0.0
    %178 = vmatprep.subr.mxu0 0.0
    %179 = vmatpush1.msra.mxu0 0.0
    %180 = vmatprep.subr.mxu0 0.0
    %181 = vmatpush1.msra.mxu0 0.0
    %182 = vmatprep.subr.mxu0 0.0
    %183 = vmatpush1.msra.mxu0 0.0
    %184 = vmatprep.subr.mxu0 0.0
    %185 = vmatpush1.msra.mxu0 0.0
    %186 = vmatprep.subr.mxu0 0.0
    %187 = vmatpush1.msra.mxu0 0.0
    %188 = vmatprep.subr.mxu0 0.0
    %189 = vmatpush1.msra.mxu0 0.0
    %190 = vmatprep.subr.mxu0 0.0
    %191 = vmatpush1.msra.mxu0 0.0
    %192 = vmatprep.subr.mxu0 0.0
    %193 = vmatpush1.msra.mxu0 0.0
    %194 = vmatprep.subr.mxu0 0.0
    %195 = vmatpush1.msra.mxu0 0.0
    %196 = vmatprep.mubr.f32.mxu0 0.0
    %197 = vmatmul.mubr.f32.gmra.mrb[0].mxu0 %v115
    %v198 = vpop.f32.mrb[0].mxu0
    %v199 = vadd.f32 0.0, %v198
    %v200 = vpop.f32.mrb[0].mxu0
    %201 = vdwg.mxu0
    %v202 = vmul.f32 %v199, 2.0
    %s203 = scalar_lea.vmem %s1, 64
    %v204 = vld [vmem:[%s203] sm:$0xff]
    %v205 = vld [vmem:[%s203 + $0x8] sm:$0xff]
    %v206 = vld [vmem:[%s203 + $0x10] sm:$0xff]
    %v207 = vld [vmem:[%s203 + $0x18] sm:$0xff]
    %v208 = vld [vmem:[%s203 + $0x20] sm:$0xff]
    %v209 = vld [vmem:[%s203 + $0x28] sm:$0xff]
    %v210 = vld [vmem:[%s203 + $0x30] sm:$0xff]
    %v211 = vld [vmem:[%s203 + $0x38] sm:$0xff]
    %v213 = vsel %vm37, %v202, 0
    %215 = vmatprep.subr.mxu0 0.0
    %216 = vmatpush1.msra.mxu0 %v204
    %217 = vmatprep.subr.mxu0 0.0
    %218 = vmatpush1.msra.mxu0 %v205
    %219 = vmatprep.subr.mxu0 0.0
    %220 = vmatpush1.msra.mxu0 %v206
    %221 = vmatprep.subr.mxu0 0.0
    %222 = vmatpush1.msra.mxu0 %v207
    %223 = vmatprep.subr.mxu0 0.0
    %224 = vmatpush1.msra.mxu0 %v208
    %225 = vmatprep.subr.mxu0 0.0
    %226 = vmatpush1.msra.mxu0 %v209
    %227 = vmatprep.subr.mxu0 0.0
    %228 = vmatpush1.msra.mxu0 %v210
    %229 = vmatprep.subr.mxu0 0.0
    %230 = vmatpush1.msra.mxu0 %v211
    %231 = vmatprep.subr.mxu0 0.0
    %232 = vmatpush1.msra.mxu0 0.0
    %233 = vmatprep.subr.mxu0 0.0
    %234 = vmatpush1.msra.mxu0 0.0
    %235 = vmatprep.subr.mxu0 0.0
    %236 = vmatpush1.msra.mxu0 0.0
    %237 = vmatprep.subr.mxu0 0.0
    %238 = vmatpush1.msra.mxu0 0.0
    %239 = vmatprep.subr.mxu0 0.0
    %240 = vmatpush1.msra.mxu0 0.0
    %241 = vmatprep.subr.mxu0 0.0
    %242 = vmatpush1.msra.mxu0 0.0
    %243 = vmatprep.subr.mxu0 0.0
    %244 = vmatpush1.msra.mxu0 0.0
    %245 = vmatprep.subr.mxu0 0.0
    %246 = vmatpush1.msra.mxu0 0.0
    %247 = vmatprep.subr.mxu0 0.0
    %248 = vmatpush1.msra.mxu0 0.0
    %249 = vmatprep.subr.mxu0 0.0
    %250 = vmatpush1.msra.mxu0 0.0
    %251 = vmatprep.subr.mxu0 0.0
    %252 = vmatpush1.msra.mxu0 0.0
    %253 = vmatprep.subr.mxu0 0.0
    %254 = vmatpush1.msra.mxu0 0.0
    %255 = vmatprep.subr.mxu0 0.0
    %256 = vmatpush1.msra.mxu0 0.0
    %257 = vmatprep.subr.mxu0 0.0
    %258 = vmatpush1.msra.mxu0 0.0
    %259 = vmatprep.subr.mxu0 0.0
    %260 = vmatpush1.msra.mxu0 0.0
    %261 = vmatprep.subr.mxu0 0.0
    %262 = vmatpush1.msra.mxu0 0.0
    %263 = vmatprep.subr.mxu0 0.0
    %264 = vmatpush1.msra.mxu0 0.0
    %265 = vmatprep.subr.mxu0 0.0
    %266 = vmatpush1.msra.mxu0 0.0
    %267 = vmatprep.subr.mxu0 0.0
    %268 = vmatpush1.msra.mxu0 0.0
    %269 = vmatprep.subr.mxu0 0.0
    %270 = vmatpush1.msra.mxu0 0.0
    %271 = vmatprep.subr.mxu0 0.0
    %272 = vmatpush1.msra.mxu0 0.0
    %273 = vmatprep.subr.mxu0 0.0
    %274 = vmatpush1.msra.mxu0 0.0
    %275 = vmatprep.subr.mxu0 0.0
    %276 = vmatpush1.msra.mxu0 0.0
    %277 = vmatprep.subr.mxu0 0.0
    %278 = vmatpush1.msra.mxu0 0.0
    %279 = vmatprep.mubr.f32.mxu0 0.0
    %280 = vmatmul.mubr.f32.gmra.mrb[0].mxu0 %v213
    %v281 = vpop.f32.mrb[0].mxu0
    %v282 = vadd.f32 0.0, %v281
    %v283 = vpop.f32.mrb[0].mxu0
    %284 = vdwg.mxu0
    %v285 = vmul.f32 %v282, 0.5
    %v286 = vmul.f32 %v282, 0.70710677
    %v287 = verf.f32.pop %v286
    %v288 = vadd.f32 %v287, 1.0
    %v289 = vmul.f32 %v285, %v288
    %s290 = scalar_lea.vmem %s2, 128
    %v291 = vld [vmem:[%s290] sm:$0xff]
    %v292 = vld [vmem:[%s290 + $0x8] sm:$0xff]
    %v293 = vld [vmem:[%s290 + $0x10] sm:$0xff]
    %v294 = vld [vmem:[%s290 + $0x18] sm:$0xff]
    %v295 = vld [vmem:[%s290 + $0x20] sm:$0xff]
    %v296 = vld [vmem:[%s290 + $0x28] sm:$0xff]
    %v297 = vld [vmem:[%s290 + $0x30] sm:$0xff]
    %v298 = vld [vmem:[%s290 + $0x38] sm:$0xff]
    %v299 = vld [vmem:[%s290 + $0x40] sm:$0xff]
    %v300 = vld [vmem:[%s290 + $0x48] sm:$0xff]
    %v301 = vld [vmem:[%s290 + $0x50] sm:$0xff]
    %v302 = vld [vmem:[%s290 + $0x58] sm:$0xff]
    %v303 = vld [vmem:[%s290 + $0x60] sm:$0xff]
    %v304 = vld [vmem:[%s290 + $0x68] sm:$0xff]
    %v305 = vld [vmem:[%s290 + $0x70] sm:$0xff]
    %v306 = vld [vmem:[%s290 + $0x78] sm:$0xff]
    %307 = vmatprep.subr.mxu0 0.0
    %308 = vmatpush1.msra.mxu0 %v291
    %309 = vmatprep.subr.mxu0 0.0
    %310 = vmatpush1.msra.mxu0 %v292
    %311 = vmatprep.subr.mxu0 0.0
    %312 = vmatpush1.msra.mxu0 %v293
    %313 = vmatprep.subr.mxu0 0.0
    %314 = vmatpush1.msra.mxu0 %v294
    %315 = vmatprep.subr.mxu0 0.0
    %316 = vmatpush1.msra.mxu0 %v295
    %317 = vmatprep.subr.mxu0 0.0
    %318 = vmatpush1.msra.mxu0 %v296
    %319 = vmatprep.subr.mxu0 0.0
    %320 = vmatpush1.msra.mxu0 %v297
    %321 = vmatprep.subr.mxu0 0.0
    %322 = vmatpush1.msra.mxu0 %v298
    %323 = vmatprep.subr.mxu0 0.0
    %324 = vmatpush1.msra.mxu0 %v299
    %325 = vmatprep.subr.mxu0 0.0
    %326 = vmatpush1.msra.mxu0 %v300
    %327 = vmatprep.subr.mxu0 0.0
    %328 = vmatpush1.msra.mxu0 %v301
    %329 = vmatprep.subr.mxu0 0.0
    %330 = vmatpush1.msra.mxu0 %v302
    %331 = vmatprep.subr.mxu0 0.0
    %332 = vmatpush1.msra.mxu0 %v303
    %333 = vmatprep.subr.mxu0 0.0
    %334 = vmatpush1.msra.mxu0 %v304
    %335 = vmatprep.subr.mxu0 0.0
    %336 = vmatpush1.msra.mxu0 %v305
    %337 = vmatprep.subr.mxu0 0.0
    %338 = vmatpush1.msra.mxu0 %v306
    %339 = vmatprep.subr.mxu0 0.0
    %340 = vmatpush1.msra.mxu0 0.0
    %341 = vmatprep.subr.mxu0 0.0
    %342 = vmatpush1.msra.mxu0 0.0
    %343 = vmatprep.subr.mxu0 0.0
    %344 = vmatpush1.msra.mxu0 0.0
    %345 = vmatprep.subr.mxu0 0.0
    %346 = vmatpush1.msra.mxu0 0.0
    %347 = vmatprep.subr.mxu0 0.0
    %348 = vmatpush1.msra.mxu0 0.0
    %349 = vmatprep.subr.mxu0 0.0
    %350 = vmatpush1.msra.mxu0 0.0
    %351 = vmatprep.subr.mxu0 0.0
    %352 = vmatpush1.msra.mxu0 0.0
    %353 = vmatprep.subr.mxu0 0.0
    %354 = vmatpush1.msra.mxu0 0.0
    %355 = vmatprep.subr.mxu0 0.0
    %356 = vmatpush1.msra.mxu0 0.0
    %357 = vmatprep.subr.mxu0 0.0
    %358 = vmatpush1.msra.mxu0 0.0
    %359 = vmatprep.subr.mxu0 0.0
    %360 = vmatpush1.msra.mxu0 0.0
    %361 = vmatprep.subr.mxu0 0.0
    %362 = vmatpush1.msra.mxu0 0.0
    %363 = vmatprep.subr.mxu0 0.0
    %364 = vmatpush1.msra.mxu0 0.0
    %365 = vmatprep.subr.mxu0 0.0
    %366 = vmatpush1.msra.mxu0 0.0
    %367 = vmatprep.subr.mxu0 0.0
    %368 = vmatpush1.msra.mxu0 0.0
    %369 = vmatprep.subr.mxu0 0.0
    %370 = vmatpush1.msra.mxu0 0.0
    %371 = vmatprep.mubr.f32.mxu0 0.0
    %372 = vmatmul.mubr.f32.gmra.mrb[0].mxu0 %v289
    %v373 = vpop.f32.mrb[0].mxu0
    %v374 = vadd.f32 0.0, %v373
    %v375 = vpop.f32.mrb[0].mxu0
    %376 = vdwg.mxu0
    %v377 = vmul.f32 %v374, 2.0
    %s378 = scalar_lea.vmem %s1, 128
    %v379 = vld [vmem:[%s378] sm:$0xff]
    %v380 = vld [vmem:[%s378 + $0x8] sm:$0xff]
    %v381 = vld [vmem:[%s378 + $0x10] sm:$0xff]
    %v382 = vld [vmem:[%s378 + $0x18] sm:$0xff]
    %v383 = vld [vmem:[%s378 + $0x20] sm:$0xff]
    %v384 = vld [vmem:[%s378 + $0x28] sm:$0xff]
    %v385 = vld [vmem:[%s378 + $0x30] sm:$0xff]
    %v386 = vld [vmem:[%s378 + $0x38] sm:$0xff]
    %v388 = vsel %vm37, %v377, 0
    %390 = vmatprep.subr.mxu0 0.0
    %391 = vmatpush1.msra.mxu0 %v379
    %392 = vmatprep.subr.mxu0 0.0
    %393 = vmatpush1.msra.mxu0 %v380
    %394 = vmatprep.subr.mxu0 0.0
    %395 = vmatpush1.msra.mxu0 %v381
    %396 = vmatprep.subr.mxu0 0.0
    %397 = vmatpush1.msra.mxu0 %v382
    %398 = vmatprep.subr.mxu0 0.0
    %399 = vmatpush1.msra.mxu0 %v383
    %400 = vmatprep.subr.mxu0 0.0
    %401 = vmatpush1.msra.mxu0 %v384
    %402 = vmatprep.subr.mxu0 0.0
    %403 = vmatpush1.msra.mxu0 %v385
    %404 = vmatprep.subr.mxu0 0.0
    %405 = vmatpush1.msra.mxu0 %v386
    %406 = vmatprep.subr.mxu0 0.0
    %407 = vmatpush1.msra.mxu0 0.0
    %408 = vmatprep.subr.mxu0 0.0
    %409 = vmatpush1.msra.mxu0 0.0
    %410 = vmatprep.subr.mxu0 0.0
    %411 = vmatpush1.msra.mxu0 0.0
    %412 = vmatprep.subr.mxu0 0.0
    %413 = vmatpush1.msra.mxu0 0.0
    %414 = vmatprep.subr.mxu0 0.0
    %415 = vmatpush1.msra.mxu0 0.0
    %416 = vmatprep.subr.mxu0 0.0
    %417 = vmatpush1.msra.mxu0 0.0
    %418 = vmatprep.subr.mxu0 0.0
    %419 = vmatpush1.msra.mxu0 0.0
    %420 = vmatprep.subr.mxu0 0.0
    %421 = vmatpush1.msra.mxu0 0.0
    %422 = vmatprep.subr.mxu0 0.0
    %423 = vmatpush1.msra.mxu0 0.0
    %424 = vmatprep.subr.mxu0 0.0
    %425 = vmatpush1.msra.mxu0 0.0
    %426 = vmatprep.subr.mxu0 0.0
    %427 = vmatpush1.msra.mxu0 0.0
    %428 = vmatprep.subr.mxu0 0.0
    %429 = vmatpush1.msra.mxu0 0.0
    %430 = vmatprep.subr.mxu0 0.0
    %431 = vmatpush1.msra.mxu0 0.0
    %432 = vmatprep.subr.mxu0 0.0
    %433 = vmatpush1.msra.mxu0 0.0
    %434 = vmatprep.subr.mxu0 0.0
    %435 = vmatpush1.msra.mxu0 0.0
    %436 = vmatprep.subr.mxu0 0.0
    %437 = vmatpush1.msra.mxu0 0.0
    %438 = vmatprep.subr.mxu0 0.0
    %439 = vmatpush1.msra.mxu0 0.0
    %440 = vmatprep.subr.mxu0 0.0
    %441 = vmatpush1.msra.mxu0 0.0
    %442 = vmatprep.subr.mxu0 0.0
    %443 = vmatpush1.msra.mxu0 0.0
    %444 = vmatprep.subr.mxu0 0.0
    %445 = vmatpush1.msra.mxu0 0.0
    %446 = vmatprep.subr.mxu0 0.0
    %447 = vmatpush1.msra.mxu0 0.0
    %448 = vmatprep.subr.mxu0 0.0
    %449 = vmatpush1.msra.mxu0 0.0
    %450 = vmatprep.subr.mxu0 0.0
    %451 = vmatpush1.msra.mxu0 0.0
    %452 = vmatprep.subr.mxu0 0.0
    %453 = vmatpush1.msra.mxu0 0.0
    %454 = vmatprep.mubr.f32.mxu0 0.0
    %455 = vmatmul.mubr.f32.gmra.mrb[0].mxu0 %v388
    %v456 = vpop.f32.mrb[0].mxu0
    %v457 = vadd.f32 0.0, %v456
    %v458 = vpop.f32.mrb[0].mxu0
    %459 = vdwg.mxu0
    %v460 = vmul.f32 %v457, 0.5
    %v461 = vmul.f32 %v457, 0.70710677
    %v462 = verf.f32.pop %v461
    %v463 = vadd.f32 %v462, 1.0
    %v464 = vmul.f32 %v460, %v463
    %s465 = scalar_lea.vmem %s2, 256
    %v466 = vld [vmem:[%s465] sm:$0xff]
    %v467 = vld [vmem:[%s465 + $0x8] sm:$0xff]
    %v468 = vld [vmem:[%s465 + $0x10] sm:$0xff]
    %v469 = vld [vmem:[%s465 + $0x18] sm:$0xff]
    %v470 = vld [vmem:[%s465 + $0x20] sm:$0xff]
    %v471 = vld [vmem:[%s465 + $0x28] sm:$0xff]
    %v472 = vld [vmem:[%s465 + $0x30] sm:$0xff]
    %v473 = vld [vmem:[%s465 + $0x38] sm:$0xff]
    %v474 = vld [vmem:[%s465 + $0x40] sm:$0xff]
    %v475 = vld [vmem:[%s465 + $0x48] sm:$0xff]
    %v476 = vld [vmem:[%s465 + $0x50] sm:$0xff]
    %v477 = vld [vmem:[%s465 + $0x58] sm:$0xff]
    %v478 = vld [vmem:[%s465 + $0x60] sm:$0xff]
    %v479 = vld [vmem:[%s465 + $0x68] sm:$0xff]
    %v480 = vld [vmem:[%s465 + $0x70] sm:$0xff]
    %v481 = vld [vmem:[%s465 + $0x78] sm:$0xff]
    %482 = vmatprep.subr.mxu0 0.0
    %483 = vmatpush1.msra.mxu0 %v466
    %484 = vmatprep.subr.mxu0 0.0
    %485 = vmatpush1.msra.mxu0 %v467
    %486 = vmatprep.subr.mxu0 0.0
    %487 = vmatpush1.msra.mxu0 %v468
    %488 = vmatprep.subr.mxu0 0.0
    %489 = vmatpush1.msra.mxu0 %v469
    %490 = vmatprep.subr.mxu0 0.0
    %491 = vmatpush1.msra.mxu0 %v470
    %492 = vmatprep.subr.mxu0 0.0
    %493 = vmatpush1.msra.mxu0 %v471
    %494 = vmatprep.subr.mxu0 0.0
    %495 = vmatpush1.msra.mxu0 %v472
    %496 = vmatprep.subr.mxu0 0.0
    %497 = vmatpush1.msra.mxu0 %v473
    %498 = vmatprep.subr.mxu0 0.0
    %499 = vmatpush1.msra.mxu0 %v474
    %500 = vmatprep.subr.mxu0 0.0
    %501 = vmatpush1.msra.mxu0 %v475
    %502 = vmatprep.subr.mxu0 0.0
    %503 = vmatpush1.msra.mxu0 %v476
    %504 = vmatprep.subr.mxu0 0.0
    %505 = vmatpush1.msra.mxu0 %v477
    %506 = vmatprep.subr.mxu0 0.0
    %507 = vmatpush1.msra.mxu0 %v478
    %508 = vmatprep.subr.mxu0 0.0
    %509 = vmatpush1.msra.mxu0 %v479
    %510 = vmatprep.subr.mxu0 0.0
    %511 = vmatpush1.msra.mxu0 %v480
    %512 = vmatprep.subr.mxu0 0.0
    %513 = vmatpush1.msra.mxu0 %v481
    %514 = vmatprep.subr.mxu0 0.0
    %515 = vmatpush1.msra.mxu0 0.0
    %516 = vmatprep.subr.mxu0 0.0
    %517 = vmatpush1.msra.mxu0 0.0
    %518 = vmatprep.subr.mxu0 0.0
    %519 = vmatpush1.msra.mxu0 0.0
    %520 = vmatprep.subr.mxu0 0.0
    %521 = vmatpush1.msra.mxu0 0.0
    %522 = vmatprep.subr.mxu0 0.0
    %523 = vmatpush1.msra.mxu0 0.0
    %524 = vmatprep.subr.mxu0 0.0
    %525 = vmatpush1.msra.mxu0 0.0
    %526 = vmatprep.subr.mxu0 0.0
    %527 = vmatpush1.msra.mxu0 0.0
    %528 = vmatprep.subr.mxu0 0.0
    %529 = vmatpush1.msra.mxu0 0.0
    %530 = vmatprep.subr.mxu0 0.0
    %531 = vmatpush1.msra.mxu0 0.0
    %532 = vmatprep.subr.mxu0 0.0
    %533 = vmatpush1.msra.mxu0 0.0
    %534 = vmatprep.subr.mxu0 0.0
    %535 = vmatpush1.msra.mxu0 0.0
    %536 = vmatprep.subr.mxu0 0.0
    %537 = vmatpush1.msra.mxu0 0.0
    %538 = vmatprep.subr.mxu0 0.0
    %539 = vmatpush1.msra.mxu0 0.0
    %540 = vmatprep.subr.mxu0 0.0
    %541 = vmatpush1.msra.mxu0 0.0
    %542 = vmatprep.subr.mxu0 0.0
    %543 = vmatpush1.msra.mxu0 0.0
    %544 = vmatprep.subr.mxu0 0.0
    %545 = vmatpush1.msra.mxu0 0.0
    %546 = vmatprep.mubr.f32.mxu0 0.0
    %547 = vmatmul.mubr.f32.gmra.mrb[0].mxu0 %v464
    %v548 = vpop.f32.mrb[0].mxu0
    %v549 = vadd.f32 0.0, %v548
    %v550 = vpop.f32.mrb[0].mxu0
    %551 = vdwg.mxu0
    %s552 = scalar_lea.vmem %s1, 192
    %v553 = vld [vmem:[%s552] sm:$0xff]
    %v554 = vld [vmem:[%s552 + $0x8] sm:$0xff]
    %v555 = vld [vmem:[%s552 + $0x10] sm:$0xff]
    %v556 = vld [vmem:[%s552 + $0x18] sm:$0xff]
    %v557 = vld [vmem:[%s552 + $0x20] sm:$0xff]
    %v558 = vld [vmem:[%s552 + $0x28] sm:$0xff]
    %v559 = vld [vmem:[%s552 + $0x30] sm:$0xff]
    %v560 = vld [vmem:[%s552 + $0x38] sm:$0xff]
    %v562 = vsel %vm37, %v549, 0
    %564 = vmatprep.subr.mxu0 0.0
    %565 = vmatpush1.msra.mxu0 %v553
    %566 = vmatprep.subr.mxu0 0.0
    %567 = vmatpush1.msra.mxu0 %v554
    %568 = vmatprep.subr.mxu0 0.0
    %569 = vmatpush1.msra.mxu0 %v555
    %570 = vmatprep.subr.mxu0 0.0
    %571 = vmatpush1.msra.mxu0 %v556
    %572 = vmatprep.subr.mxu0 0.0
    %573 = vmatpush1.msra.mxu0 %v557
    %574 = vmatprep.subr.mxu0 0.0
    %575 = vmatpush1.msra.mxu0 %v558
    %576 = vmatprep.subr.mxu0 0.0
    %577 = vmatpush1.msra.mxu0 %v559
    %578 = vmatprep.subr.mxu0 0.0
    %579 = vmatpush1.msra.mxu0 %v560
    %580 = vmatprep.subr.mxu0 0.0
    %581 = vmatpush1.msra.mxu0 0.0
    %582 = vmatprep.subr.mxu0 0.0
    %583 = vmatpush1.msra.mxu0 0.0
    %584 = vmatprep.subr.mxu0 0.0
    %585 = vmatpush1.msra.mxu0 0.0
    %586 = vmatprep.subr.mxu0 0.0
    %587 = vmatpush1.msra.mxu0 0.0
    %588 = vmatprep.subr.mxu0 0.0
    %589 = vmatpush1.msra.mxu0 0.0
    %590 = vmatprep.subr.mxu0 0.0
    %591 = vmatpush1.msra.mxu0 0.0
    %592 = vmatprep.subr.mxu0 0.0
    %593 = vmatpush1.msra.mxu0 0.0
    %594 = vmatprep.subr.mxu0 0.0
    %595 = vmatpush1.msra.mxu0 0.0
    %596 = vmatprep.subr.mxu0 0.0
    %597 = vmatpush1.msra.mxu0 0.0
    %598 = vmatprep.subr.mxu0 0.0
    %599 = vmatpush1.msra.mxu0 0.0
    %600 = vmatprep.subr.mxu0 0.0
    %601 = vmatpush1.msra.mxu0 0.0
    %602 = vmatprep.subr.mxu0 0.0
    %603 = vmatpush1.msra.mxu0 0.0
    %604 = vmatprep.subr.mxu0 0.0
    %605 = vmatpush1.msra.mxu0 0.0
    %606 = vmatprep.subr.mxu0 0.0
    %607 = vmatpush1.msra.mxu0 0.0
    %608 = vmatprep.subr.mxu0 0.0
    %609 = vmatpush1.msra.mxu0 0.0
    %610 = vmatprep.subr.mxu0 0.0
    %611 = vmatpush1.msra.mxu0 0.0
    %612 = vmatprep.subr.mxu0 0.0
    %613 = vmatpush1.msra.mxu0 0.0
    %614 = vmatprep.subr.mxu0 0.0
    %615 = vmatpush1.msra.mxu0 0.0
    %616 = vmatprep.subr.mxu0 0.0
    %617 = vmatpush1.msra.mxu0 0.0
    %618 = vmatprep.subr.mxu0 0.0
    %619 = vmatpush1.msra.mxu0 0.0
    %620 = vmatprep.subr.mxu0 0.0
    %621 = vmatpush1.msra.mxu0 0.0
    %622 = vmatprep.subr.mxu0 0.0
    %623 = vmatpush1.msra.mxu0 0.0
    %624 = vmatprep.subr.mxu0 0.0
    %625 = vmatpush1.msra.mxu0 0.0
    %626 = vmatprep.subr.mxu0 0.0
    %627 = vmatpush1.msra.mxu0 0.0
    %628 = vmatprep.mubr.f32.mxu0 0.0
    %629 = vmatmul.mubr.f32.gmra.mrb[0].mxu0 %v562
    %v630 = vpop.f32.mrb[0].mxu0
    %v631 = vadd.f32 0.0, %v630
    %v632 = vpop.f32.mrb[0].mxu0
    %633 = vdwg.mxu0
    %v634 = vmul.f32 %v631, 0.5
    %v635 = vmul.f32 %v631, 0.70710677
    %v636 = verf.f32.pop %v635
    %v637 = vadd.f32 %v636, 1.0
    %v638 = vmul.f32 %v634, %v637
    %s639 = scalar_lea.vmem %s2, 384
    %v640 = vld [vmem:[%s639] sm:$0xff]
    %v641 = vld [vmem:[%s639 + $0x8] sm:$0xff]
    %v642 = vld [vmem:[%s639 + $0x10] sm:$0xff]
    %v643 = vld [vmem:[%s639 + $0x18] sm:$0xff]
    %v644 = vld [vmem:[%s639 + $0x20] sm:$0xff]
    %v645 = vld [vmem:[%s639 + $0x28] sm:$0xff]
    %v646 = vld [vmem:[%s639 + $0x30] sm:$0xff]
    %v647 = vld [vmem:[%s639 + $0x38] sm:$0xff]
    %v648 = vld [vmem:[%s639 + $0x40] sm:$0xff]
    %v649 = vld [vmem:[%s639 + $0x48] sm:$0xff]
    %v650 = vld [vmem:[%s639 + $0x50] sm:$0xff]
    %v651 = vld [vmem:[%s639 + $0x58] sm:$0xff]
    %v652 = vld [vmem:[%s639 + $0x60] sm:$0xff]
    %v653 = vld [vmem:[%s639 + $0x68] sm:$0xff]
    %v654 = vld [vmem:[%s639 + $0x70] sm:$0xff]
    %v655 = vld [vmem:[%s639 + $0x78] sm:$0xff]
    %656 = vmatprep.subr.mxu0 0.0
    %657 = vmatpush1.msra.mxu0 %v640
    %658 = vmatprep.subr.mxu0 0.0
    %659 = vmatpush1.msra.mxu0 %v641
    %660 = vmatprep.subr.mxu0 0.0
    %661 = vmatpush1.msra.mxu0 %v642
    %662 = vmatprep.subr.mxu0 0.0
    %663 = vmatpush1.msra.mxu0 %v643
    %664 = vmatprep.subr.mxu0 0.0
    %665 = vmatpush1.msra.mxu0 %v644
    %666 = vmatprep.subr.mxu0 0.0
    %667 = vmatpush1.msra.mxu0 %v645
    %668 = vmatprep.subr.mxu0 0.0
    %669 = vmatpush1.msra.mxu0 %v646
    %670 = vmatprep.subr.mxu0 0.0
    %671 = vmatpush1.msra.mxu0 %v647
    %672 = vmatprep.subr.mxu0 0.0
    %673 = vmatpush1.msra.mxu0 %v648
    %674 = vmatprep.subr.mxu0 0.0
    %675 = vmatpush1.msra.mxu0 %v649
    %676 = vmatprep.subr.mxu0 0.0
    %677 = vmatpush1.msra.mxu0 %v650
    %678 = vmatprep.subr.mxu0 0.0
    %679 = vmatpush1.msra.mxu0 %v651
    %680 = vmatprep.subr.mxu0 0.0
    %681 = vmatpush1.msra.mxu0 %v652
    %682 = vmatprep.subr.mxu0 0.0
    %683 = vmatpush1.msra.mxu0 %v653
    %684 = vmatprep.subr.mxu0 0.0
    %685 = vmatpush1.msra.mxu0 %v654
    %686 = vmatprep.subr.mxu0 0.0
    %687 = vmatpush1.msra.mxu0 %v655
    %688 = vmatprep.subr.mxu0 0.0
    %689 = vmatpush1.msra.mxu0 0.0
    %690 = vmatprep.subr.mxu0 0.0
    %691 = vmatpush1.msra.mxu0 0.0
    %692 = vmatprep.subr.mxu0 0.0
    %693 = vmatpush1.msra.mxu0 0.0
    %694 = vmatprep.subr.mxu0 0.0
    %695 = vmatpush1.msra.mxu0 0.0
    %696 = vmatprep.subr.mxu0 0.0
    %697 = vmatpush1.msra.mxu0 0.0
    %698 = vmatprep.subr.mxu0 0.0
    %699 = vmatpush1.msra.mxu0 0.0
    %700 = vmatprep.subr.mxu0 0.0
    %701 = vmatpush1.msra.mxu0 0.0
    %702 = vmatprep.subr.mxu0 0.0
    %703 = vmatpush1.msra.mxu0 0.0
    %704 = vmatprep.subr.mxu0 0.0
    %705 = vmatpush1.msra.mxu0 0.0
    %706 = vmatprep.subr.mxu0 0.0
    %707 = vmatpush1.msra.mxu0 0.0
    %708 = vmatprep.subr.mxu0 0.0
    %709 = vmatpush1.msra.mxu0 0.0
    %710 = vmatprep.subr.mxu0 0.0
    %711 = vmatpush1.msra.mxu0 0.0
    %712 = vmatprep.subr.mxu0 0.0
    %713 = vmatpush1.msra.mxu0 0.0
    %714 = vmatprep.subr.mxu0 0.0
    %715 = vmatpush1.msra.mxu0 0.0
    %716 = vmatprep.subr.mxu0 0.0
    %717 = vmatpush1.msra.mxu0 0.0
    %718 = vmatprep.subr.mxu0 0.0
    %719 = vmatpush1.msra.mxu0 0.0
    %720 = vmatprep.mubr.f32.mxu0 0.0
    %721 = vmatmul.mubr.f32.gmra.mrb[0].mxu0 %v638
    %v722 = vpop.f32.mrb[0].mxu0
    %v723 = vadd.f32 0.0, %v722
    %v724 = vpop.f32.mrb[0].mxu0
    %725 = vdwg.mxu0
    %s726 = scalar_lea.vmem %s1, 256
    %v727 = vld [vmem:[%s726] sm:$0xff]
    %v728 = vld [vmem:[%s726 + $0x8] sm:$0xff]
    %v729 = vld [vmem:[%s726 + $0x10] sm:$0xff]
    %v730 = vld [vmem:[%s726 + $0x18] sm:$0xff]
    %v731 = vld [vmem:[%s726 + $0x20] sm:$0xff]
    %v732 = vld [vmem:[%s726 + $0x28] sm:$0xff]
    %v733 = vld [vmem:[%s726 + $0x30] sm:$0xff]
    %v734 = vld [vmem:[%s726 + $0x38] sm:$0xff]
    %v736 = vsel %vm37, %v723, 0
    %738 = vmatprep.subr.mxu0 0.0
    %739 = vmatpush1.msra.mxu0 %v727
    %740 = vmatprep.subr.mxu0 0.0
    %741 = vmatpush1.msra.mxu0 %v728
    %742 = vmatprep.subr.mxu0 0.0
    %743 = vmatpush1.msra.mxu0 %v729
    %744 = vmatprep.subr.mxu0 0.0
    %745 = vmatpush1.msra.mxu0 %v730
    %746 = vmatprep.subr.mxu0 0.0
    %747 = vmatpush1.msra.mxu0 %v731
    %748 = vmatprep.subr.mxu0 0.0
    %749 = vmatpush1.msra.mxu0 %v732
    %750 = vmatprep.subr.mxu0 0.0
    %751 = vmatpush1.msra.mxu0 %v733
    %752 = vmatprep.subr.mxu0 0.0
    %753 = vmatpush1.msra.mxu0 %v734
    %754 = vmatprep.subr.mxu0 0.0
    %755 = vmatpush1.msra.mxu0 0.0
    %756 = vmatprep.subr.mxu0 0.0
    %757 = vmatpush1.msra.mxu0 0.0
    %758 = vmatprep.subr.mxu0 0.0
    %759 = vmatpush1.msra.mxu0 0.0
    %760 = vmatprep.subr.mxu0 0.0
    %761 = vmatpush1.msra.mxu0 0.0
    %762 = vmatprep.subr.mxu0 0.0
    %763 = vmatpush1.msra.mxu0 0.0
    %764 = vmatprep.subr.mxu0 0.0
    %765 = vmatpush1.msra.mxu0 0.0
    %766 = vmatprep.subr.mxu0 0.0
    %767 = vmatpush1.msra.mxu0 0.0
    %768 = vmatprep.subr.mxu0 0.0
    %769 = vmatpush1.msra.mxu0 0.0
    %770 = vmatprep.subr.mxu0 0.0
    %771 = vmatpush1.msra.mxu0 0.0
    %772 = vmatprep.subr.mxu0 0.0
    %773 = vmatpush1.msra.mxu0 0.0
    %774 = vmatprep.subr.mxu0 0.0
    %775 = vmatpush1.msra.mxu0 0.0
    %776 = vmatprep.subr.mxu0 0.0
    %777 = vmatpush1.msra.mxu0 0.0
    %778 = vmatprep.subr.mxu0 0.0
    %779 = vmatpush1.msra.mxu0 0.0
    %780 = vmatprep.subr.mxu0 0.0
    %781 = vmatpush1.msra.mxu0 0.0
    %782 = vmatprep.subr.mxu0 0.0
    %783 = vmatpush1.msra.mxu0 0.0
    %784 = vmatprep.subr.mxu0 0.0
    %785 = vmatpush1.msra.mxu0 0.0
    %786 = vmatprep.subr.mxu0 0.0
    %787 = vmatpush1.msra.mxu0 0.0
    %788 = vmatprep.subr.mxu0 0.0
    %789 = vmatpush1.msra.mxu0 0.0
    %790 = vmatprep.subr.mxu0 0.0
    %791 = vmatpush1.msra.mxu0 0.0
    %792 = vmatprep.subr.mxu0 0.0
    %793 = vmatpush1.msra.mxu0 0.0
    %794 = vmatprep.subr.mxu0 0.0
    %795 = vmatpush1.msra.mxu0 0.0
    %796 = vmatprep.subr.mxu0 0.0
    %797 = vmatpush1.msra.mxu0 0.0
    %798 = vmatprep.subr.mxu0 0.0
    %799 = vmatpush1.msra.mxu0 0.0
    %800 = vmatprep.subr.mxu0 0.0
    %801 = vmatpush1.msra.mxu0 0.0
    %802 = vmatprep.mubr.f32.mxu0 0.0
    %803 = vmatmul.mubr.f32.gmra.mrb[0].mxu0 %v736
    %v804 = vpop.f32.mrb[0].mxu0
    %v805 = vadd.f32 0.0, %v804
    %v806 = vpop.f32.mrb[0].mxu0
    %807 = vdwg.mxu0
    %v808 = vmul.f32 %v805, 0.5
    %v809 = vmul.f32 %v805, 0.70710677
    %v810 = verf.f32.pop %v809
    %v811 = vadd.f32 %v810, 1.0
    %v812 = vmul.f32 %v808, %v811
    %s813 = scalar_lea.vmem %s2, 512
    %v814 = vld [vmem:[%s813] sm:$0xff]
    %v815 = vld [vmem:[%s813 + $0x8] sm:$0xff]
    %v816 = vld [vmem:[%s813 + $0x10] sm:$0xff]
    %v817 = vld [vmem:[%s813 + $0x18] sm:$0xff]
    %v818 = vld [vmem:[%s813 + $0x20] sm:$0xff]
    %v819 = vld [vmem:[%s813 + $0x28] sm:$0xff]
    %v820 = vld [vmem:[%s813 + $0x30] sm:$0xff]
    %v821 = vld [vmem:[%s813 + $0x38] sm:$0xff]
    %v822 = vld [vmem:[%s813 + $0x40] sm:$0xff]
    %v823 = vld [vmem:[%s813 + $0x48] sm:$0xff]
    %v824 = vld [vmem:[%s813 + $0x50] sm:$0xff]
    %v825 = vld [vmem:[%s813 + $0x58] sm:$0xff]
    %v826 = vld [vmem:[%s813 + $0x60] sm:$0xff]
    %v827 = vld [vmem:[%s813 + $0x68] sm:$0xff]
    %v828 = vld [vmem:[%s813 + $0x70] sm:$0xff]
    %v829 = vld [vmem:[%s813 + $0x78] sm:$0xff]
    %830 = vmatprep.subr.mxu0 0.0
    %831 = vmatpush1.msra.mxu0 %v814
    %832 = vmatprep.subr.mxu0 0.0
    %833 = vmatpush1.msra.mxu0 %v815
    %834 = vmatprep.subr.mxu0 0.0
    %835 = vmatpush1.msra.mxu0 %v816
    %836 = vmatprep.subr.mxu0 0.0
    %837 = vmatpush1.msra.mxu0 %v817
    %838 = vmatprep.subr.mxu0 0.0
    %839 = vmatpush1.msra.mxu0 %v818
    %840 = vmatprep.subr.mxu0 0.0
    %841 = vmatpush1.msra.mxu0 %v819
    %842 = vmatprep.subr.mxu0 0.0
    %843 = vmatpush1.msra.mxu0 %v820
    %844 = vmatprep.subr.mxu0 0.0
    %845 = vmatpush1.msra.mxu0 %v821
    %846 = vmatprep.subr.mxu0 0.0
    %847 = vmatpush1.msra.mxu0 %v822
    %848 = vmatprep.subr.mxu0 0.0
    %849 = vmatpush1.msra.mxu0 %v823
    %850 = vmatprep.subr.mxu0 0.0
    %851 = vmatpush1.msra.mxu0 %v824
    %852 = vmatprep.subr.mxu0 0.0
    %853 = vmatpush1.msra.mxu0 %v825
    %854 = vmatprep.subr.mxu0 0.0
    %855 = vmatpush1.msra.mxu0 %v826
    %856 = vmatprep.subr.mxu0 0.0
    %857 = vmatpush1.msra.mxu0 %v827
    %858 = vmatprep.subr.mxu0 0.0
    %859 = vmatpush1.msra.mxu0 %v828
    %860 = vmatprep.subr.mxu0 0.0
    %861 = vmatpush1.msra.mxu0 %v829
    %862 = vmatprep.subr.mxu0 0.0
    %863 = vmatpush1.msra.mxu0 0.0
    %864 = vmatprep.subr.mxu0 0.0
    %865 = vmatpush1.msra.mxu0 0.0
    %866 = vmatprep.subr.mxu0 0.0
    %867 = vmatpush1.msra.mxu0 0.0
    %868 = vmatprep.subr.mxu0 0.0
    %869 = vmatpush1.msra.mxu0 0.0
    %870 = vmatprep.subr.mxu0 0.0
    %871 = vmatpush1.msra.mxu0 0.0
    %872 = vmatprep.subr.mxu0 0.0
    %873 = vmatpush1.msra.mxu0 0.0
    %874 = vmatprep.subr.mxu0 0.0
    %875 = vmatpush1.msra.mxu0 0.0
    %876 = vmatprep.subr.mxu0 0.0
    %877 = vmatpush1.msra.mxu0 0.0
    %878 = vmatprep.subr.mxu0 0.0
    %879 = vmatpush1.msra.mxu0 0.0
    %880 = vmatprep.subr.mxu0 0.0
    %881 = vmatpush1.msra.mxu0 0.0
    %882 = vmatprep.subr.mxu0 0.0
    %883 = vmatpush1.msra.mxu0 0.0
    %884 = vmatprep.subr.mxu0 0.0
    %885 = vmatpush1.msra.mxu0 0.0
    %886 = vmatprep.subr.mxu0 0.0
    %887 = vmatpush1.msra.mxu0 0.0
    %888 = vmatprep.subr.mxu0 0.0
    %889 = vmatpush1.msra.mxu0 0.0
    %890 = vmatprep.subr.mxu0 0.0
    %891 = vmatpush1.msra.mxu0 0.0
    %892 = vmatprep.subr.mxu0 0.0
    %893 = vmatpush1.msra.mxu0 0.0
    %894 = vmatprep.mubr.f32.mxu0 0.0
    %895 = vmatmul.mubr.f32.gmra.mrb[0].mxu0 %v812
    %v896 = vpop.f32.mrb[0].mxu0
    %v897 = vadd.f32 0.0, %v896
    %v898 = vpop.f32.mrb[0].mxu0
    %899 = vdwg.mxu0
    %s900 = scalar_lea.vmem %s1, 320
    %v901 = vld [vmem:[%s900] sm:$0xff]
    %v902 = vld [vmem:[%s900 + $0x8] sm:$0xff]
    %v903 = vld [vmem:[%s900 + $0x10] sm:$0xff]
    %v904 = vld [vmem:[%s900 + $0x18] sm:$0xff]
    %v905 = vld [vmem:[%s900 + $0x20] sm:$0xff]
    %v906 = vld [vmem:[%s900 + $0x28] sm:$0xff]
    %v907 = vld [vmem:[%s900 + $0x30] sm:$0xff]
    %v908 = vld [vmem:[%s900 + $0x38] sm:$0xff]
    %v910 = vsel %vm37, %v897, 0
    %912 = vmatprep.subr.mxu0 0.0
    %913 = vmatpush1.msra.mxu0 %v901
    %914 = vmatprep.subr.mxu0 0.0
    %915 = vmatpush1.msra.mxu0 %v902
    %916 = vmatprep.subr.mxu0 0.0
    %917 = vmatpush1.msra.mxu0 %v903
    %918 = vmatprep.subr.mxu0 0.0
    %919 = vmatpush1.msra.mxu0 %v904
    %920 = vmatprep.subr.mxu0 0.0
    %921 = vmatpush1.msra.mxu0 %v905
    %922 = vmatprep.subr.mxu0 0.0
    %923 = vmatpush1.msra.mxu0 %v906
    %924 = vmatprep.subr.mxu0 0.0
    %925 = vmatpush1.msra.mxu0 %v907
    %926 = vmatprep.subr.mxu0 0.0
    %927 = vmatpush1.msra.mxu0 %v908
    %928 = vmatprep.subr.mxu0 0.0
    %929 = vmatpush1.msra.mxu0 0.0
    %930 = vmatprep.subr.mxu0 0.0
    %931 = vmatpush1.msra.mxu0 0.0
    %932 = vmatprep.subr.mxu0 0.0
    %933 = vmatpush1.msra.mxu0 0.0
    %934 = vmatprep.subr.mxu0 0.0
    %935 = vmatpush1.msra.mxu0 0.0
    %936 = vmatprep.subr.mxu0 0.0
    %937 = vmatpush1.msra.mxu0 0.0
    %938 = vmatprep.subr.mxu0 0.0
    %939 = vmatpush1.msra.mxu0 0.0
    %940 = vmatprep.subr.mxu0 0.0
    %941 = vmatpush1.msra.mxu0 0.0
    %942 = vmatprep.subr.mxu0 0.0
    %943 = vmatpush1.msra.mxu0 0.0
    %944 = vmatprep.subr.mxu0 0.0
    %945 = vmatpush1.msra.mxu0 0.0
    %946 = vmatprep.subr.mxu0 0.0
    %947 = vmatpush1.msra.mxu0 0.0
    %948 = vmatprep.subr.mxu0 0.0
    %949 = vmatpush1.msra.mxu0 0.0
    %950 = vmatprep.subr.mxu0 0.0
    %951 = vmatpush1.msra.mxu0 0.0
    %952 = vmatprep.subr.mxu0 0.0
    %953 = vmatpush1.msra.mxu0 0.0
    %954 = vmatprep.subr.mxu0 0.0
    %955 = vmatpush1.msra.mxu0 0.0
    %956 = vmatprep.subr.mxu0 0.0
    %957 = vmatpush1.msra.mxu0 0.0
    %958 = vmatprep.subr.mxu0 0.0
    %959 = vmatpush1.msra.mxu0 0.0
    %960 = vmatprep.subr.mxu0 0.0
    %961 = vmatpush1.msra.mxu0 0.0
    %962 = vmatprep.subr.mxu0 0.0
    %963 = vmatpush1.msra.mxu0 0.0
    %964 = vmatprep.subr.mxu0 0.0
    %965 = vmatpush1.msra.mxu0 0.0
    %966 = vmatprep.subr.mxu0 0.0
    %967 = vmatpush1.msra.mxu0 0.0
    %968 = vmatprep.subr.mxu0 0.0
    %969 = vmatpush1.msra.mxu0 0.0
    %970 = vmatprep.subr.mxu0 0.0
    %971 = vmatpush1.msra.mxu0 0.0
    %972 = vmatprep.subr.mxu0 0.0
    %973 = vmatpush1.msra.mxu0 0.0
    %974 = vmatprep.subr.mxu0 0.0
    %975 = vmatpush1.msra.mxu0 0.0
    %976 = vmatprep.mubr.f32.mxu0 0.0
    %977 = vmatmul.mubr.f32.gmra.mrb[0].mxu0 %v910
    %v978 = vpop.f32.mrb[0].mxu0
    %v979 = vadd.f32 0.0, %v978
    %v980 = vpop.f32.mrb[0].mxu0
    %981 = vdwg.mxu0
    %v982 = vmul.f32 %v979, 0.5
    %v983 = vmul.f32 %v979, 0.70710677
    %v984 = verf.f32.pop %v983
    %v985 = vadd.f32 %v984, 1.0
    %v986 = vmul.f32 %v982, %v985
    %s987 = scalar_lea.vmem %s2, 640
    %v988 = vld [vmem:[%s987] sm:$0xff]
    %v989 = vld [vmem:[%s987 + $0x8] sm:$0xff]
    %v990 = vld [vmem:[%s987 + $0x10] sm:$0xff]
    %v991 = vld [vmem:[%s987 + $0x18] sm:$0xff]
    %v992 = vld [vmem:[%s987 + $0x20] sm:$0xff]
    %v993 = vld [vmem:[%s987 + $0x28] sm:$0xff]
    %v994 = vld [vmem:[%s987 + $0x30] sm:$0xff]
    %v995 = vld [vmem:[%s987 + $0x38] sm:$0xff]
    %v996 = vld [vmem:[%s987 + $0x40] sm:$0xff]
    %v997 = vld [vmem:[%s987 + $0x48] sm:$0xff]
    %v998 = vld [vmem:[%s987 + $0x50] sm:$0xff]
    %v999 = vld [vmem:[%s987 + $0x58] sm:$0xff]
    %v1000 = vld [vmem:[%s987 + $0x60] sm:$0xff]
    %v1001 = vld [vmem:[%s987 + $0x68] sm:$0xff]
    %v1002 = vld [vmem:[%s987 + $0x70] sm:$0xff]
    %v1003 = vld [vmem:[%s987 + $0x78] sm:$0xff]
    %1004 = vmatprep.subr.mxu0 0.0
    %1005 = vmatpush1.msra.mxu0 %v988
    %1006 = vmatprep.subr.mxu0 0.0
    %1007 = vmatpush1.msra.mxu0 %v989
    %1008 = vmatprep.subr.mxu0 0.0
    %1009 = vmatpush1.msra.mxu0 %v990
    %1010 = vmatprep.subr.mxu0 0.0
    %1011 = vmatpush1.msra.mxu0 %v991
    %1012 = vmatprep.subr.mxu0 0.0
    %1013 = vmatpush1.msra.mxu0 %v992
    %1014 = vmatprep.subr.mxu0 0.0
    %1015 = vmatpush1.msra.mxu0 %v993
    %1016 = vmatprep.subr.mxu0 0.0
    %1017 = vmatpush1.msra.mxu0 %v994
    %1018 = vmatprep.subr.mxu0 0.0
    %1019 = vmatpush1.msra.mxu0 %v995
    %1020 = vmatprep.subr.mxu0 0.0
    %1021 = vmatpush1.msra.mxu0 %v996
    %1022 = vmatprep.subr.mxu0 0.0
    %1023 = vmatpush1.msra.mxu0 %v997
    %1024 = vmatprep.subr.mxu0 0.0
    %1025 = vmatpush1.msra.mxu0 %v998
    %1026 = vmatprep.subr.mxu0 0.0
    %1027 = vmatpush1.msra.mxu0 %v999
    %1028 = vmatprep.subr.mxu0 0.0
    %1029 = vmatpush1.msra.mxu0 %v1000
    %1030 = vmatprep.subr.mxu0 0.0
    %1031 = vmatpush1.msra.mxu0 %v1001
    %1032 = vmatprep.subr.mxu0 0.0
    %1033 = vmatpush1.msra.mxu0 %v1002
    %1034 = vmatprep.subr.mxu0 0.0
    %1035 = vmatpush1.msra.mxu0 %v1003
    %1036 = vmatprep.subr.mxu0 0.0
    %1037 = vmatpush1.msra.mxu0 0.0
    %1038 = vmatprep.subr.mxu0 0.0
    %1039 = vmatpush1.msra.mxu0 0.0
    %1040 = vmatprep.subr.mxu0 0.0
    %1041 = vmatpush1.msra.mxu0 0.0
    %1042 = vmatprep.subr.mxu0 0.0
    %1043 = vmatpush1.msra.mxu0 0.0
    %1044 = vmatprep.subr.mxu0 0.0
    %1045 = vmatpush1.msra.mxu0 0.0
    %1046 = vmatprep.subr.mxu0 0.0
    %1047 = vmatpush1.msra.mxu0 0.0
    %1048 = vmatprep.subr.mxu0 0.0
    %1049 = vmatpush1.msra.mxu0 0.0
    %1050 = vmatprep.subr.mxu0 0.0
    %1051 = vmatpush1.msra.mxu0 0.0
    %1052 = vmatprep.subr.mxu0 0.0
    %1053 = vmatpush1.msra.mxu0 0.0
    %1054 = vmatprep.subr.mxu0 0.0
    %1055 = vmatpush1.msra.mxu0 0.0
    %1056 = vmatprep.subr.mxu0 0.0
    %1057 = vmatpush1.msra.mxu0 0.0
    %1058 = vmatprep.subr.mxu0 0.0
    %1059 = vmatpush1.msra.mxu0 0.0
    %1060 = vmatprep.subr.mxu0 0.0
    %1061 = vmatpush1.msra.mxu0 0.0
    %1062 = vmatprep.subr.mxu0 0.0
    %1063 = vmatpush1.msra.mxu0 0.0
    %1064 = vmatprep.subr.mxu0 0.0
    %1065 = vmatpush1.msra.mxu0 0.0
    %1066 = vmatprep.subr.mxu0 0.0
    %1067 = vmatpush1.msra.mxu0 0.0
    %1068 = vmatprep.mubr.f32.mxu0 0.0
    %1069 = vmatmul.mubr.f32.gmra.mrb[0].mxu0 %v986
    %v1070 = vpop.f32.mrb[0].mxu0
    %v1071 = vadd.f32 0.0, %v1070
    %v1072 = vpop.f32.mrb[0].mxu0
    %1073 = vdwg.mxu0
    %s1074 = scalar_lea.vmem %s1, 384
    %v1075 = vld [vmem:[%s1074] sm:$0xff]
    %v1076 = vld [vmem:[%s1074 + $0x8] sm:$0xff]
    %v1077 = vld [vmem:[%s1074 + $0x10] sm:$0xff]
    %v1078 = vld [vmem:[%s1074 + $0x18] sm:$0xff]
    %v1079 = vld [vmem:[%s1074 + $0x20] sm:$0xff]
    %v1080 = vld [vmem:[%s1074 + $0x28] sm:$0xff]
    %v1081 = vld [vmem:[%s1074 + $0x30] sm:$0xff]
    %v1082 = vld [vmem:[%s1074 + $0x38] sm:$0xff]
    %v1084 = vsel %vm37, %v1071, 0
    %1086 = vmatprep.subr.mxu0 0.0
    %1087 = vmatpush1.msra.mxu0 %v1075
    %1088 = vmatprep.subr.mxu0 0.0
    %1089 = vmatpush1.msra.mxu0 %v1076
    %1090 = vmatprep.subr.mxu0 0.0
    %1091 = vmatpush1.msra.mxu0 %v1077
    %1092 = vmatprep.subr.mxu0 0.0
    %1093 = vmatpush1.msra.mxu0 %v1078
    %1094 = vmatprep.subr.mxu0 0.0
    %1095 = vmatpush1.msra.mxu0 %v1079
    %1096 = vmatprep.subr.mxu0 0.0
    %1097 = vmatpush1.msra.mxu0 %v1080
    %1098 = vmatprep.subr.mxu0 0.0
    %1099 = vmatpush1.msra.mxu0 %v1081
    %1100 = vmatprep.subr.mxu0 0.0
    %1101 = vmatpush1.msra.mxu0 %v1082
    %1102 = vmatprep.subr.mxu0 0.0
    %1103 = vmatpush1.msra.mxu0 0.0
    %1104 = vmatprep.subr.mxu0 0.0
    %1105 = vmatpush1.msra.mxu0 0.0
    %1106 = vmatprep.subr.mxu0 0.0
    %1107 = vmatpush1.msra.mxu0 0.0
    %1108 = vmatprep.subr.mxu0 0.0
    %1109 = vmatpush1.msra.mxu0 0.0
    %1110 = vmatprep.subr.mxu0 0.0
    %1111 = vmatpush1.msra.mxu0 0.0
    %1112 = vmatprep.subr.mxu0 0.0
    %1113 = vmatpush1.msra.mxu0 0.0
    %1114 = vmatprep.subr.mxu0 0.0
    %1115 = vmatpush1.msra.mxu0 0.0
    %1116 = vmatprep.subr.mxu0 0.0
    %1117 = vmatpush1.msra.mxu0 0.0
    %1118 = vmatprep.subr.mxu0 0.0
    %1119 = vmatpush1.msra.mxu0 0.0
    %1120 = vmatprep.subr.mxu0 0.0
    %1121 = vmatpush1.msra.mxu0 0.0
    %1122 = vmatprep.subr.mxu0 0.0
    %1123 = vmatpush1.msra.mxu0 0.0
    %1124 = vmatprep.subr.mxu0 0.0
    %1125 = vmatpush1.msra.mxu0 0.0
    %1126 = vmatprep.subr.mxu0 0.0
    %1127 = vmatpush1.msra.mxu0 0.0
    %1128 = vmatprep.subr.mxu0 0.0
    %1129 = vmatpush1.msra.mxu0 0.0
    %1130 = vmatprep.subr.mxu0 0.0
    %1131 = vmatpush1.msra.mxu0 0.0
    %1132 = vmatprep.subr.mxu0 0.0
    %1133 = vmatpush1.msra.mxu0 0.0
    %1134 = vmatprep.subr.mxu0 0.0
    %1135 = vmatpush1.msra.mxu0 0.0
    %1136 = vmatprep.subr.mxu0 0.0
    %1137 = vmatpush1.msra.mxu0 0.0
    %1138 = vmatprep.subr.mxu0 0.0
    %1139 = vmatpush1.msra.mxu0 0.0
    %1140 = vmatprep.subr.mxu0 0.0
    %1141 = vmatpush1.msra.mxu0 0.0
    %1142 = vmatprep.subr.mxu0 0.0
    %1143 = vmatpush1.msra.mxu0 0.0
    %1144 = vmatprep.subr.mxu0 0.0
    %1145 = vmatpush1.msra.mxu0 0.0
    %1146 = vmatprep.subr.mxu0 0.0
    %1147 = vmatpush1.msra.mxu0 0.0
    %1148 = vmatprep.subr.mxu0 0.0
    %1149 = vmatpush1.msra.mxu0 0.0
    %1150 = vmatprep.mubr.f32.mxu0 0.0
    %1151 = vmatmul.mubr.f32.gmra.mrb[0].mxu0 %v1084
    %v1152 = vpop.f32.mrb[0].mxu0
    %v1153 = vadd.f32 0.0, %v1152
    %v1154 = vpop.f32.mrb[0].mxu0
    %1155 = vdwg.mxu0
    %v1156 = vmul.f32 %v1153, 0.5
    %v1157 = vmul.f32 %v1153, 0.70710677
    %v1158 = verf.f32.pop %v1157
    %v1159 = vadd.f32 %v1158, 1.0
    %v1160 = vmul.f32 %v1156, %v1159
    %s1161 = scalar_lea.vmem %s2, 768
    %v1162 = vld [vmem:[%s1161] sm:$0xff]
    %v1163 = vld [vmem:[%s1161 + $0x8] sm:$0xff]
    %v1164 = vld [vmem:[%s1161 + $0x10] sm:$0xff]
    %v1165 = vld [vmem:[%s1161 + $0x18] sm:$0xff]
    %v1166 = vld [vmem:[%s1161 + $0x20] sm:$0xff]
    %v1167 = vld [vmem:[%s1161 + $0x28] sm:$0xff]
    %v1168 = vld [vmem:[%s1161 + $0x30] sm:$0xff]
    %v1169 = vld [vmem:[%s1161 + $0x38] sm:$0xff]
    %v1170 = vld [vmem:[%s1161 + $0x40] sm:$0xff]
    %v1171 = vld [vmem:[%s1161 + $0x48] sm:$0xff]
    %v1172 = vld [vmem:[%s1161 + $0x50] sm:$0xff]
    %v1173 = vld [vmem:[%s1161 + $0x58] sm:$0xff]
    %v1174 = vld [vmem:[%s1161 + $0x60] sm:$0xff]
    %v1175 = vld [vmem:[%s1161 + $0x68] sm:$0xff]
    %v1176 = vld [vmem:[%s1161 + $0x70] sm:$0xff]
    %v1177 = vld [vmem:[%s1161 + $0x78] sm:$0xff]
    %1178 = vmatprep.subr.mxu0 0.0
    %1179 = vmatpush1.msra.mxu0 %v1162
    %1180 = vmatprep.subr.mxu0 0.0
    %1181 = vmatpush1.msra.mxu0 %v1163
    %1182 = vmatprep.subr.mxu0 0.0
    %1183 = vmatpush1.msra.mxu0 %v1164
    %1184 = vmatprep.subr.mxu0 0.0
    %1185 = vmatpush1.msra.mxu0 %v1165
    %1186 = vmatprep.subr.mxu0 0.0
    %1187 = vmatpush1.msra.mxu0 %v1166
    %1188 = vmatprep.subr.mxu0 0.0
    %1189 = vmatpush1.msra.mxu0 %v1167
    %1190 = vmatprep.subr.mxu0 0.0
    %1191 = vmatpush1.msra.mxu0 %v1168
    %1192 = vmatprep.subr.mxu0 0.0
    %1193 = vmatpush1.msra.mxu0 %v1169
    %1194 = vmatprep.subr.mxu0 0.0
    %1195 = vmatpush1.msra.mxu0 %v1170
    %1196 = vmatprep.subr.mxu0 0.0
    %1197 = vmatpush1.msra.mxu0 %v1171
    %1198 = vmatprep.subr.mxu0 0.0
    %1199 = vmatpush1.msra.mxu0 %v1172
    %1200 = vmatprep.subr.mxu0 0.0
    %1201 = vmatpush1.msra.mxu0 %v1173
    %1202 = vmatprep.subr.mxu0 0.0
    %1203 = vmatpush1.msra.mxu0 %v1174
    %1204 = vmatprep.subr.mxu0 0.0
    %1205 = vmatpush1.msra.mxu0 %v1175
    %1206 = vmatprep.subr.mxu0 0.0
    %1207 = vmatpush1.msra.mxu0 %v1176
    %1208 = vmatprep.subr.mxu0 0.0
    %1209 = vmatpush1.msra.mxu0 %v1177
    %1210 = vmatprep.subr.mxu0 0.0
    %1211 = vmatpush1.msra.mxu0 0.0
    %1212 = vmatprep.subr.mxu0 0.0
    %1213 = vmatpush1.msra.mxu0 0.0
    %1214 = vmatprep.subr.mxu0 0.0
    %1215 = vmatpush1.msra.mxu0 0.0
    %1216 = vmatprep.subr.mxu0 0.0
    %1217 = vmatpush1.msra.mxu0 0.0
    %1218 = vmatprep.subr.mxu0 0.0
    %1219 = vmatpush1.msra.mxu0 0.0
    %1220 = vmatprep.subr.mxu0 0.0
    %1221 = vmatpush1.msra.mxu0 0.0
    %1222 = vmatprep.subr.mxu0 0.0
    %1223 = vmatpush1.msra.mxu0 0.0
    %1224 = vmatprep.subr.mxu0 0.0
    %1225 = vmatpush1.msra.mxu0 0.0
    %1226 = vmatprep.subr.mxu0 0.0
    %1227 = vmatpush1.msra.mxu0 0.0
    %1228 = vmatprep.subr.mxu0 0.0
    %1229 = vmatpush1.msra.mxu0 0.0
    %1230 = vmatprep.subr.mxu0 0.0
    %1231 = vmatpush1.msra.mxu0 0.0
    %1232 = vmatprep.subr.mxu0 0.0
    %1233 = vmatpush1.msra.mxu0 0.0
    %1234 = vmatprep.subr.mxu0 0.0
    %1235 = vmatpush1.msra.mxu0 0.0
    %1236 = vmatprep.subr.mxu0 0.0
    %1237 = vmatpush1.msra.mxu0 0.0
    %1238 = vmatprep.subr.mxu0 0.0
    %1239 = vmatpush1.msra.mxu0 0.0
    %1240 = vmatprep.subr.mxu0 0.0
    %1241 = vmatpush1.msra.mxu0 0.0
    %1242 = vmatprep.mubr.f32.mxu0 0.0
    %1243 = vmatmul.mubr.f32.gmra.mrb[0].mxu0 %v1160
    %v1244 = vpop.f32.mrb[0].mxu0
    %v1245 = vadd.f32 0.0, %v1244
    %v1246 = vpop.f32.mrb[0].mxu0
    %1247 = vdwg.mxu0
    %s1248 = scalar_lea.vmem %s1, 448
    %v1249 = vld [vmem:[%s1248] sm:$0xff]
    %v1250 = vld [vmem:[%s1248 + $0x8] sm:$0xff]
    %v1251 = vld [vmem:[%s1248 + $0x10] sm:$0xff]
    %v1252 = vld [vmem:[%s1248 + $0x18] sm:$0xff]
    %v1253 = vld [vmem:[%s1248 + $0x20] sm:$0xff]
    %v1254 = vld [vmem:[%s1248 + $0x28] sm:$0xff]
    %v1255 = vld [vmem:[%s1248 + $0x30] sm:$0xff]
    %v1256 = vld [vmem:[%s1248 + $0x38] sm:$0xff]
    %v1258 = vsel %vm37, %v1245, 0
    %1260 = vmatprep.subr.mxu0 0.0
    %1261 = vmatpush1.msra.mxu0 %v1249
    %1262 = vmatprep.subr.mxu0 0.0
    %1263 = vmatpush1.msra.mxu0 %v1250
    %1264 = vmatprep.subr.mxu0 0.0
    %1265 = vmatpush1.msra.mxu0 %v1251
    %1266 = vmatprep.subr.mxu0 0.0
    %1267 = vmatpush1.msra.mxu0 %v1252
    %1268 = vmatprep.subr.mxu0 0.0
    %1269 = vmatpush1.msra.mxu0 %v1253
    %1270 = vmatprep.subr.mxu0 0.0
    %1271 = vmatpush1.msra.mxu0 %v1254
    %1272 = vmatprep.subr.mxu0 0.0
    %1273 = vmatpush1.msra.mxu0 %v1255
    %1274 = vmatprep.subr.mxu0 0.0
    %1275 = vmatpush1.msra.mxu0 %v1256
    %1276 = vmatprep.subr.mxu0 0.0
    %1277 = vmatpush1.msra.mxu0 0.0
    %1278 = vmatprep.subr.mxu0 0.0
    %1279 = vmatpush1.msra.mxu0 0.0
    %1280 = vmatprep.subr.mxu0 0.0
    %1281 = vmatpush1.msra.mxu0 0.0
    %1282 = vmatprep.subr.mxu0 0.0
    %1283 = vmatpush1.msra.mxu0 0.0
    %1284 = vmatprep.subr.mxu0 0.0
    %1285 = vmatpush1.msra.mxu0 0.0
    %1286 = vmatprep.subr.mxu0 0.0
    %1287 = vmatpush1.msra.mxu0 0.0
    %1288 = vmatprep.subr.mxu0 0.0
    %1289 = vmatpush1.msra.mxu0 0.0
    %1290 = vmatprep.subr.mxu0 0.0
    %1291 = vmatpush1.msra.mxu0 0.0
    %1292 = vmatprep.subr.mxu0 0.0
    %1293 = vmatpush1.msra.mxu0 0.0
    %1294 = vmatprep.subr.mxu0 0.0
    %1295 = vmatpush1.msra.mxu0 0.0
    %1296 = vmatprep.subr.mxu0 0.0
    %1297 = vmatpush1.msra.mxu0 0.0
    %1298 = vmatprep.subr.mxu0 0.0
    %1299 = vmatpush1.msra.mxu0 0.0
    %1300 = vmatprep.subr.mxu0 0.0
    %1301 = vmatpush1.msra.mxu0 0.0
    %1302 = vmatprep.subr.mxu0 0.0
    %1303 = vmatpush1.msra.mxu0 0.0
    %1304 = vmatprep.subr.mxu0 0.0
    %1305 = vmatpush1.msra.mxu0 0.0
    %1306 = vmatprep.subr.mxu0 0.0
    %1307 = vmatpush1.msra.mxu0 0.0
    %1308 = vmatprep.subr.mxu0 0.0
    %1309 = vmatpush1.msra.mxu0 0.0
    %1310 = vmatprep.subr.mxu0 0.0
    %1311 = vmatpush1.msra.mxu0 0.0
    %1312 = vmatprep.subr.mxu0 0.0
    %1313 = vmatpush1.msra.mxu0 0.0
    %1314 = vmatprep.subr.mxu0 0.0
    %1315 = vmatpush1.msra.mxu0 0.0
    %1316 = vmatprep.subr.mxu0 0.0
    %1317 = vmatpush1.msra.mxu0 0.0
    %1318 = vmatprep.subr.mxu0 0.0
    %1319 = vmatpush1.msra.mxu0 0.0
    %1320 = vmatprep.subr.mxu0 0.0
    %1321 = vmatpush1.msra.mxu0 0.0
    %1322 = vmatprep.subr.mxu0 0.0
    %1323 = vmatpush1.msra.mxu0 0.0
    %1324 = vmatprep.mubr.f32.mxu0 0.0
    %1325 = vmatmul.mubr.f32.gmra.mrb[0].mxu0 %v1258
    %v1326 = vpop.f32.mrb[0].mxu0
    %v1327 = vadd.f32 0.0, %v1326
    %v1328 = vpop.f32.mrb[0].mxu0
    %1329 = vdwg.mxu0
    %v1330 = vmul.f32 %v1327, 0.5
    %v1331 = vmul.f32 %v1327, 0.70710677
    %v1332 = verf.f32.pop %v1331
    %v1333 = vadd.f32 %v1332, 1.0
    %v1334 = vmul.f32 %v1330, %v1333
    %s1335 = scalar_lea.vmem %s2, 896
    %v1336 = vld [vmem:[%s1335] sm:$0xff]
    %v1337 = vld [vmem:[%s1335 + $0x8] sm:$0xff]
    %v1338 = vld [vmem:[%s1335 + $0x10] sm:$0xff]
    %v1339 = vld [vmem:[%s1335 + $0x18] sm:$0xff]
    %v1340 = vld [vmem:[%s1335 + $0x20] sm:$0xff]
    %v1341 = vld [vmem:[%s1335 + $0x28] sm:$0xff]
    %v1342 = vld [vmem:[%s1335 + $0x30] sm:$0xff]
    %v1343 = vld [vmem:[%s1335 + $0x38] sm:$0xff]
    %v1344 = vld [vmem:[%s1335 + $0x40] sm:$0xff]
    %v1345 = vld [vmem:[%s1335 + $0x48] sm:$0xff]
    %v1346 = vld [vmem:[%s1335 + $0x50] sm:$0xff]
    %v1347 = vld [vmem:[%s1335 + $0x58] sm:$0xff]
    %v1348 = vld [vmem:[%s1335 + $0x60] sm:$0xff]
    %v1349 = vld [vmem:[%s1335 + $0x68] sm:$0xff]
    %v1350 = vld [vmem:[%s1335 + $0x70] sm:$0xff]
    %v1351 = vld [vmem:[%s1335 + $0x78] sm:$0xff]
    %1352 = vmatprep.subr.mxu0 0.0
    %1353 = vmatpush1.msra.mxu0 %v1336
    %1354 = vmatprep.subr.mxu0 0.0
    %1355 = vmatpush1.msra.mxu0 %v1337
    %1356 = vmatprep.subr.mxu0 0.0
    %1357 = vmatpush1.msra.mxu0 %v1338
    %1358 = vmatprep.subr.mxu0 0.0
    %1359 = vmatpush1.msra.mxu0 %v1339
    %1360 = vmatprep.subr.mxu0 0.0
    %1361 = vmatpush1.msra.mxu0 %v1340
    %1362 = vmatprep.subr.mxu0 0.0
    %1363 = vmatpush1.msra.mxu0 %v1341
    %1364 = vmatprep.subr.mxu0 0.0
    %1365 = vmatpush1.msra.mxu0 %v1342
    %1366 = vmatprep.subr.mxu0 0.0
    %1367 = vmatpush1.msra.mxu0 %v1343
    %1368 = vmatprep.subr.mxu0 0.0
    %1369 = vmatpush1.msra.mxu0 %v1344
    %1370 = vmatprep.subr.mxu0 0.0
    %1371 = vmatpush1.msra.mxu0 %v1345
    %1372 = vmatprep.subr.mxu0 0.0
    %1373 = vmatpush1.msra.mxu0 %v1346
    %1374 = vmatprep.subr.mxu0 0.0
    %1375 = vmatpush1.msra.mxu0 %v1347
    %1376 = vmatprep.subr.mxu0 0.0
    %1377 = vmatpush1.msra.mxu0 %v1348
    %1378 = vmatprep.subr.mxu0 0.0
    %1379 = vmatpush1.msra.mxu0 %v1349
    %1380 = vmatprep.subr.mxu0 0.0
    %1381 = vmatpush1.msra.mxu0 %v1350
    %1382 = vmatprep.subr.mxu0 0.0
    %1383 = vmatpush1.msra.mxu0 %v1351
    %1384 = vmatprep.subr.mxu0 0.0
    %1385 = vmatpush1.msra.mxu0 0.0
    %1386 = vmatprep.subr.mxu0 0.0
    %1387 = vmatpush1.msra.mxu0 0.0
    %1388 = vmatprep.subr.mxu0 0.0
    %1389 = vmatpush1.msra.mxu0 0.0
    %1390 = vmatprep.subr.mxu0 0.0
    %1391 = vmatpush1.msra.mxu0 0.0
    %1392 = vmatprep.subr.mxu0 0.0
    %1393 = vmatpush1.msra.mxu0 0.0
    %1394 = vmatprep.subr.mxu0 0.0
    %1395 = vmatpush1.msra.mxu0 0.0
    %1396 = vmatprep.subr.mxu0 0.0
    %1397 = vmatpush1.msra.mxu0 0.0
    %1398 = vmatprep.subr.mxu0 0.0
    %1399 = vmatpush1.msra.mxu0 0.0
    %1400 = vmatprep.subr.mxu0 0.0
    %1401 = vmatpush1.msra.mxu0 0.0
    %1402 = vmatprep.subr.mxu0 0.0
    %1403 = vmatpush1.msra.mxu0 0.0
    %1404 = vmatprep.subr.mxu0 0.0
    %1405 = vmatpush1.msra.mxu0 0.0
    %1406 = vmatprep.subr.mxu0 0.0
    %1407 = vmatpush1.msra.mxu0 0.0
    %1408 = vmatprep.subr.mxu0 0.0
    %1409 = vmatpush1.msra.mxu0 0.0
    %1410 = vmatprep.subr.mxu0 0.0
    %1411 = vmatpush1.msra.mxu0 0.0
    %1412 = vmatprep.subr.mxu0 0.0
    %1413 = vmatpush1.msra.mxu0 0.0
    %1414 = vmatprep.subr.mxu0 0.0
    %1415 = vmatpush1.msra.mxu0 0.0
    %1416 = vmatprep.mubr.f32.mxu0 0.0
    %1417 = vmatmul.mubr.f32.gmra.mrb[0].mxu0 %v1334
    %v1418 = vpop.f32.mrb[0].mxu0
    %v1419 = vadd.f32 0.0, %v1418
    %v1420 = vpop.f32.mrb[0].mxu0
    %1421 = vdwg.mxu0
    %v1422 = vmul.f32 %v1419, 8.0
    %v1423 = vadd.f32 %v1422, 4.0
    %1424 = vst.msk [vmem:[#allocation5] sm:$0xff] %vm37, %v1423
    // Predicated region
    $region18: #{tpu_custom_call.1} parent=1 // pred_check
      _
    $region19: #{tpu_custom_call.1} parent=1 // pred_check_branch
      %1426 = sbr.rel (0) target = $region21
    $region20: #{tpu_custom_call.1} parent=1 // pred_region
      %s1428 = ssub.s32 128, 128
      %1429 = vsyncadd [#allocation4], %s1428
      %s1431 = sshll.u32 [#allocation5], 4
      %s1432 = int_to_ptr.vmem [resolvable:$true] %s1431
      %1434 = dma.vmem_to_hbm [thread:$0]  %s1432, 128, %s3, [#allocation4]
    $region21: #{tpu_custom_call.1} parent=1 // pred_fallthru
      _
    // Predicated region
    $region22: #{tpu_custom_call.1} parent=1 // pred_check
      _
    $region23: #{tpu_custom_call.1} parent=1 // pred_check_branch
      %1436 = sbr.rel (0) target = $region25
    $region24: #{tpu_custom_call.1} parent=1 // pred_region
      %1437 = dma.done [#allocation4], 128
    $region25: #{tpu_custom_call.1} parent=1 // pred_fallthru
      _
    %1438 = vsyncpa [#allocation3], 1
    %1439 = vsyncpa [#allocation4], 1

</llo_original>
